<compile_context>
chip_gen: v7x
topology: tpu7x:2x2x1
jax: 0.10.0
libtpu: 0.0.40
codegen_flags: <defaults>
</compile_context>

<pallas_src>
import functools

import jax
import jax.numpy as jnp
from jax.experimental import pallas as pl
from jax.experimental.pallas import tpu as pltpu


def _round_up(x, m):
    return ((x + m - 1) // m) * m


def _pick_tile(n, batch, max_tile=1024):
    """Pick a lane-tile for the point axis.

    Preference order:
      1) largest multiple of 128 that divides n, is <= max_tile, and keeps
         batch * (n // tile) >= 4 grid steps (megacore + pipelining),
      2) largest multiple of 128 that divides n and is <= max_tile,
      3) fall back to padding n up to a multiple of the tile.
    Returns (tile_n, n_padded).
    """
    candidates = range(min(max_tile, _round_up(n, 128)), 127, -128)
    for c in candidates:
        if n % c == 0 and batch * (n // c) >= 4:
            return c, n
    for c in candidates:
        if n % c == 0:
            return c, n
    n_pad128 = _round_up(n, 128)
    tile = min(max_tile, n_pad128)
    return tile, _round_up(n, tile)


def _fused_pointwise_mlp_kernel(x_ref,
                                w1_ref, b1_ref,
                                w2_ref, b2_ref,
                                w3_ref, b3_ref,
                                w4_ref,
                                o_ref):
    # x_ref: (1, C_in, T) f32 tile of points (channel-major, N on lanes).
    # w1: f32 (of1, C_in); w2/w3/w4: bf16; bK: (C_out, 1) f32 bias.
    x = x_ref[0]                                                        # (C_in, T) f32

    # conv1 (*bn1 scale folded) + bias + relu, all-f32 matmul (K=16, ~free).
    h = jnp.dot(w1_ref[...], x, preferred_element_type=jnp.float32)     # (of1, T)
    h = jnp.maximum(h + b1_ref[...], 0.0).astype(jnp.bfloat16)          # fused epilogue

    # conv2 + bn2 + relu   (dropout = identity in eval)
    h = jnp.dot(w2_ref[...], h, preferred_element_type=jnp.float32)     # (of2, T)
    h = jnp.maximum(h + b2_ref[...], 0.0).astype(jnp.bfloat16)

    # conv3 + bn3 + relu
    h = jnp.dot(w3_ref[...], h, preferred_element_type=jnp.float32)     # (of3, T)
    h = jnp.maximum(h + b3_ref[...], 0.0).astype(jnp.bfloat16)

    # conv4 (no bn / no relu); output channels padded to a sublane multiple.
    o_ref[0] = jnp.dot(w4_ref[...], h,
                       preferred_element_type=jnp.float32)              # (c_pad, T)


def normal_prediction_forward(x_ncl, params, *, max_tile_n=1024, eps=1e-5):
    """x_ncl: (B, C_in, N) float32. Returns (B, N, 3) float32 (== permute(0,2,1))."""
    B, C_in, N = x_ncl.shape
    w1, w2, w3, w4 = params["w1"], params["w2"], params["w3"], params["w4"]
    of1, of2, of3 = w1.shape[0], w2.shape[0], w3.shape[0]
    c_out = w4.shape[0]

    # --- fold eval-mode BatchNorm into the conv weights + a f32 bias ---
    def fold(w, bn_stats, dtype):
        gamma, beta, mean, var = bn_stats
        scale = gamma / jnp.sqrt(var + eps)                     # (C_out,)
        w_folded = (w * scale[:, None]).astype(dtype)           # (C_out, C_in)
        bias = (beta - mean * scale)[:, None].astype(jnp.float32)  # (C_out, 1)
        return w_folded, bias

    # Layer 1 stays f32 (tighter numerics on the raw coordinates, <6% of FLOPs);
    # the FLOP-dominant layers 2/3 and layer 4 use bf16 operands.
    w1f, b1 = fold(w1, params["bn1"], jnp.float32)
    w2f, b2 = fold(w2, params["bn2"], jnp.bfloat16)
    w3f, b3 = fold(w3, params["bn3"], jnp.bfloat16)

    # Pad conv4 output channels (3 -> 8) so the final matmul / store are aligned.
    c_out_pad = max(8, _round_up(c_out, 8))
    w4p = jnp.zeros((c_out_pad, of3), jnp.float32).at[:c_out].set(w4)
    w4p = w4p.astype(jnp.bfloat16)

    # --- tile the point axis (prefer a tile that divides N: no input jnp.pad) ---
    tile_n, n_pad = _pick_tile(N, B, max_tile=max_tile_n)
    assert tile_n % 128 == 0
    x = x_ncl if n_pad == N else jnp.pad(x_ncl, ((0, 0), (0, 0), (0, n_pad - N)))

    grid = (B, n_pad // tile_n)
    full = lambda b, j: (0, 0)   # resident (grid-invariant) operands

    flops = 2 * B * n_pad * (C_in * of1 + of1 * of2 + of2 * of3 + of3 * c_out_pad)
    weight_bytes = 4 * of1 * C_in + 2 * (of2 * of1 + of3 * of2 + c_out_pad * of3) \
        + 4 * (of1 + of2 + of3)
    bytes_accessed = B * C_in * n_pad * 4 + B * c_out_pad * n_pad * 4 + weight_bytes

    out = pl.pallas_call(
        _fused_pointwise_mlp_kernel,
        out_shape=jax.ShapeDtypeStruct((B, c_out_pad, n_pad), jnp.float32),
        grid_spec=pltpu.PrefetchScalarGridSpec(
            num_scalar_prefetch=0,
            grid=grid,
            in_specs=[
                pl.BlockSpec((1, C_in, tile_n), lambda b, j: (b, 0, j)),  # x tile
                pl.BlockSpec((of1, C_in), full),                          # W1*s1 (f32)
                pl.BlockSpec((of1, 1), full),                             # bn1 bias
                pl.BlockSpec((of2, of1), full),                           # W2*s2 (bf16)
                pl.BlockSpec((of2, 1), full),
                pl.BlockSpec((of3, of2), full),                           # W3*s3 (bf16)
                pl.BlockSpec((of3, 1), full),
                pl.BlockSpec((c_out_pad, of3), full),                     # W4 (padded)
            ],
            out_specs=pl.BlockSpec((1, c_out_pad, tile_n), lambda b, j: (b, 0, j)),
        ),
        compiler_params=pltpu.CompilerParams(
            dimension_semantics=("parallel", "parallel")),
        cost_estimate=pl.CostEstimate(flops=int(flops), transcendentals=0,
                                      bytes_accessed=int(bytes_accessed)),
    )(x, w1f, b1, w2f, b2, w3f, b3, w4p)

    # (B, c_out_pad, n_pad) -> (B, 3, N) -> (B, N, 3) == .permute(0, 2, 1)
    out = out[:, :c_out, :N]
    return jnp.transpose(out, (0, 2, 1))


def make_params(key, input_size, of1=256, of2=256, of3=128, c_out=3):
    """Deterministic synthetic Conv1d(k=1) weights + BatchNorm running stats."""
    ks = jax.random.split(key, 16)

    def conv_w(k, o, i):
        return jax.random.normal(k, (o, i), jnp.float32) * 0.05

    def bn_stats(k0, k1, k2, k3, c):
        gamma = 1.0 + 0.1 * jax.random.normal(k0, (c,), jnp.float32)
        beta = 0.1 * jax.random.normal(k1, (c,), jnp.float32)
        mean = 0.1 * jax.random.normal(k2, (c,), jnp.float32)
        var = jnp.abs(jax.random.normal(k3, (c,), jnp.float32)) + 0.5
        return (gamma, beta, mean, var)

    return dict(
        w1=conv_w(ks[0], of1, input_size), bn1=bn_stats(ks[4], ks[5], ks[6], ks[7], of1),
        w2=conv_w(ks[1], of2, of1),        bn2=bn_stats(ks[8], ks[9], ks[10], ks[11], of2),
        w3=conv_w(ks[2], of3, of2),        bn3=bn_stats(ks[12], ks[13], ks[14], ks[15], of3),
        w4=conv_w(ks[3], c_out, of3),
    )


def reference_forward(x_ncl, params, eps=1e-5):
    """Pure-JAX f32 reference: same math as the PyTorch eval forward."""
    def conv(x, w):                       # x: (B, C_in, N), w: (C_out, C_in)
        return jnp.einsum("oc,bcn->bon", w, x)

    def bn(x, stats):
        gamma, beta, mean, var = stats
        s = gamma / jnp.sqrt(var + eps)
        return x * s[None, :, None] + (beta - mean * s)[None, :, None]

    h = jax.nn.relu(bn(conv(x_ncl, params["w1"]), params["bn1"]))   # dp1 = identity
    h = jax.nn.relu(bn(conv(h, params["w2"]), params["bn2"]))       # dp2 = identity
    h = jax.nn.relu(bn(conv(h, params["w3"]), params["bn3"]))
    h = conv(h, params["w4"])
    return jnp.transpose(h, (0, 2, 1))                              # (B, N, 3)


if __name__ == "__main__":
    B, input_size, N = 2, 16, 1024          # x: (B, C_in, N), PyTorch NCL layout
    key = jax.random.PRNGKey(0)
    kx, kp = jax.random.split(key)
    x = jax.random.normal(kx, (B, input_size, N), jnp.float32)
    params = make_params(kp, input_size)

    fwd = jax.jit(functools.partial(normal_prediction_forward, max_tile_n=1024))
    out = fwd(x, params)
    out = jax.block_until_ready(out)

    ref = reference_forward(x, params)
    assert out.shape == (B, N, 3), out.shape
    # bf16 operands (layers 2-4) / f32 accumulation -> loosened tolerance vs f32 ref.
    assert jnp.allclose(out, ref, atol=3e-2, rtol=3e-2), "mismatch vs reference"

    print("KERNEL_OK")
</pallas_src>

<mosaic_0001>
module attributes {stable_mosaic.version = 11 : i64} {
  func.func @_fused_pointwise_mlp_kernel(%arg0: i32, %arg1: i32, %arg2: memref<1x16x512xf32, #tpu.memory_space<vmem>>, %arg3: memref<256x16xf32, #tpu.memory_space<vmem>>, %arg4: memref<256x1xf32, #tpu.memory_space<vmem>>, %arg5: memref<256x256xbf16, #tpu.memory_space<vmem>>, %arg6: memref<256x1xf32, #tpu.memory_space<vmem>>, %arg7: memref<128x256xbf16, #tpu.memory_space<vmem>>, %arg8: memref<128x1xf32, #tpu.memory_space<vmem>>, %arg9: memref<8x128xbf16, #tpu.memory_space<vmem>>, %arg10: memref<1x8x512xf32, #tpu.memory_space<vmem>>) attributes {dimension_semantics = [#tpu.dimension_semantics<parallel>, #tpu.dimension_semantics<parallel>], iteration_bounds = array<i64: 2, 2>, scalar_prefetch = 0 : i64, scratch_operands = 0 : i64, tpu.core_type = #tpu.core_type<tc>, window_params = [{transform_indices = @transform_0, window_bounds = array<i64: 1, 16, 512>}, {pipeline_mode = #tpu.pipeline_mode<synchronous>, transform_indices = @transform_1, window_bounds = array<i64: 256, 16>}, {pipeline_mode = #tpu.pipeline_mode<synchronous>, transform_indices = @transform_2, window_bounds = array<i64: 256, 1>}, {pipeline_mode = #tpu.pipeline_mode<synchronous>, transform_indices = @transform_3, window_bounds = array<i64: 256, 256>}, {pipeline_mode = #tpu.pipeline_mode<synchronous>, transform_indices = @transform_4, window_bounds = array<i64: 256, 1>}, {pipeline_mode = #tpu.pipeline_mode<synchronous>, transform_indices = @transform_5, window_bounds = array<i64: 128, 256>}, {pipeline_mode = #tpu.pipeline_mode<synchronous>, transform_indices = @transform_6, window_bounds = array<i64: 128, 1>}, {pipeline_mode = #tpu.pipeline_mode<synchronous>, transform_indices = @transform_7, window_bounds = array<i64: 8, 128>}, {transform_indices = @transform_8, window_bounds = array<i64: 1, 8, 512>}]} {
    %c0 = arith.constant 0 : index
    %c0_0 = arith.constant 0 : index
    %c0_1 = arith.constant 0 : index
    %0 = vector.load %arg2[%c0, %c0_0, %c0_1] : memref<1x16x512xf32, #tpu.memory_space<vmem>>, vector<1x16x512xf32>
    %1 = vector.shape_cast %0 : vector<1x16x512xf32> to vector<16x512xf32>
    %c0_2 = arith.constant 0 : index
    %c0_3 = arith.constant 0 : index
    %2 = vector.load %arg3[%c0_2, %c0_3] : memref<256x16xf32, #tpu.memory_space<vmem>>, vector<256x16xf32>
    %cst = arith.constant dense<0.000000e+00> : vector<256x512xf32>
    %3 = tpu.matmul %2, %1, %cst {dimension_numbers = #tpu.dot_dimension_numbers<[1], [0], [0], [1], [0, 0, 1, 1], [], []>} : vector<256x16xf32>, vector<16x512xf32>, vector<256x512xf32> -> vector<256x512xf32>
    %c0_4 = arith.constant 0 : index
    %c0_5 = arith.constant 0 : index
    %4 = vector.load %arg4[%c0_4, %c0_5] : memref<256x1xf32, #tpu.memory_space<vmem>>, vector<256x1xf32>
    %5 = vector.broadcast %4 : vector<256x1xf32> to vector<256x512xf32>
    %6 = arith.addf %3, %5 : vector<256x512xf32>
    %cst_6 = arith.constant 0.000000e+00 : f32
    %7 = vector.broadcast %cst_6 : f32 to vector<256x512xf32>
    %8 = arith.maximumf %6, %7 : vector<256x512xf32>
    %9 = arith.truncf %8 : vector<256x512xf32> to vector<256x512xbf16>
    %c0_7 = arith.constant 0 : index
    %c0_8 = arith.constant 0 : index
    %10 = vector.load %arg5[%c0_7, %c0_8] : memref<256x256xbf16, #tpu.memory_space<vmem>>, vector<256x256xbf16>
    %cst_9 = arith.constant dense<0.000000e+00> : vector<256x512xf32>
    %11 = tpu.matmul %10, %9, %cst_9 {dimension_numbers = #tpu.dot_dimension_numbers<[1], [0], [0], [1], [0, 0, 1, 1], [], []>} : vector<256x256xbf16>, vector<256x512xbf16>, vector<256x512xf32> -> vector<256x512xf32>
    %c0_10 = arith.constant 0 : index
    %c0_11 = arith.constant 0 : index
    %12 = vector.load %arg6[%c0_10, %c0_11] : memref<256x1xf32, #tpu.memory_space<vmem>>, vector<256x1xf32>
    %13 = vector.broadcast %12 : vector<256x1xf32> to vector<256x512xf32>
    %14 = arith.addf %11, %13 : vector<256x512xf32>
    %cst_12 = arith.constant 0.000000e+00 : f32
    %15 = vector.broadcast %cst_12 : f32 to vector<256x512xf32>
    %16 = arith.maximumf %14, %15 : vector<256x512xf32>
    %17 = arith.truncf %16 : vector<256x512xf32> to vector<256x512xbf16>
    %c0_13 = arith.constant 0 : index
    %c0_14 = arith.constant 0 : index
    %18 = vector.load %arg7[%c0_13, %c0_14] : memref<128x256xbf16, #tpu.memory_space<vmem>>, vector<128x256xbf16>
    %cst_15 = arith.constant dense<0.000000e+00> : vector<128x512xf32>
    %19 = tpu.matmul %18, %17, %cst_15 {dimension_numbers = #tpu.dot_dimension_numbers<[1], [0], [0], [1], [0, 0, 1, 1], [], []>} : vector<128x256xbf16>, vector<256x512xbf16>, vector<128x512xf32> -> vector<128x512xf32>
    %c0_16 = arith.constant 0 : index
    %c0_17 = arith.constant 0 : index
    %20 = vector.load %arg8[%c0_16, %c0_17] : memref<128x1xf32, #tpu.memory_space<vmem>>, vector<128x1xf32>
    %21 = vector.broadcast %20 : vector<128x1xf32> to vector<128x512xf32>
    %22 = arith.addf %19, %21 : vector<128x512xf32>
    %cst_18 = arith.constant 0.000000e+00 : f32
    %23 = vector.broadcast %cst_18 : f32 to vector<128x512xf32>
    %24 = arith.maximumf %22, %23 : vector<128x512xf32>
    %25 = arith.truncf %24 : vector<128x512xf32> to vector<128x512xbf16>
    %c0_19 = arith.constant 0 : index
    %c0_20 = arith.constant 0 : index
    %26 = vector.load %arg9[%c0_19, %c0_20] : memref<8x128xbf16, #tpu.memory_space<vmem>>, vector<8x128xbf16>
    %cst_21 = arith.constant dense<0.000000e+00> : vector<8x512xf32>
    %27 = tpu.matmul %26, %25, %cst_21 {dimension_numbers = #tpu.dot_dimension_numbers<[1], [0], [0], [1], [0, 0, 1, 1], [], []>} : vector<8x128xbf16>, vector<128x512xbf16>, vector<8x512xf32> -> vector<8x512xf32>
    %c0_22 = arith.constant 0 : index
    %c0_23 = arith.constant 0 : index
    %c0_24 = arith.constant 0 : index
    %28 = vector.load %arg10[%c0_22, %c0_23, %c0_24] : memref<1x8x512xf32, #tpu.memory_space<vmem>>, vector<1x8x512xf32>
    %29 = vector.shape_cast %28 : vector<1x8x512xf32> to vector<8x512xf32>
    %30 = vector.shape_cast %27 : vector<8x512xf32> to vector<1x8x512xf32>
    tpu.vector_store %arg10[%c0_22, %c0_23, %c0_24], %30 {strides = array<i32>} : memref<1x8x512xf32, #tpu.memory_space<vmem>>, vector<1x8x512xf32>,
    return
  }
  func.func @transform_0(%arg0: i32, %arg1: i32) -> (i32, i32, i32) {
    %c0_i32 = arith.constant 0 : i32
    %c0_i32_0 = arith.constant 0 : i32
    return %arg0, %c0_i32, %arg1 : i32, i32, i32
  }
  func.func @transform_1(%arg0: i32, %arg1: i32) -> (i32, i32) {
    %c0_i32 = arith.constant 0 : i32
    %c0_i32_0 = arith.constant 0 : i32
    %c0_i32_1 = arith.constant 0 : i32
    return %c0_i32, %c0_i32_0 : i32, i32
  }
  func.func @transform_2(%arg0: i32, %arg1: i32) -> (i32, i32) {
    %c0_i32 = arith.constant 0 : i32
    %c0_i32_0 = arith.constant 0 : i32
    %c0_i32_1 = arith.constant 0 : i32
    return %c0_i32, %c0_i32_0 : i32, i32
  }
  func.func @transform_3(%arg0: i32, %arg1: i32) -> (i32, i32) {
    %c0_i32 = arith.constant 0 : i32
    %c0_i32_0 = arith.constant 0 : i32
    %c0_i32_1 = arith.constant 0 : i32
    return %c0_i32, %c0_i32_0 : i32, i32
  }
  func.func @transform_4(%arg0: i32, %arg1: i32) -> (i32, i32) {
    %c0_i32 = arith.constant 0 : i32
    %c0_i32_0 = arith.constant 0 : i32
    %c0_i32_1 = arith.constant 0 : i32
    return %c0_i32, %c0_i32_0 : i32, i32
  }
  func.func @transform_5(%arg0: i32, %arg1: i32) -> (i32, i32) {
    %c0_i32 = arith.constant 0 : i32
    %c0_i32_0 = arith.constant 0 : i32
    %c0_i32_1 = arith.constant 0 : i32
    return %c0_i32, %c0_i32_0 : i32, i32
  }
  func.func @transform_6(%arg0: i32, %arg1: i32) -> (i32, i32) {
    %c0_i32 = arith.constant 0 : i32
    %c0_i32_0 = arith.constant 0 : i32
    %c0_i32_1 = arith.constant 0 : i32
    return %c0_i32, %c0_i32_0 : i32, i32
  }
  func.func @transform_7(%arg0: i32, %arg1: i32) -> (i32, i32) {
    %c0_i32 = arith.constant 0 : i32
    %c0_i32_0 = arith.constant 0 : i32
    %c0_i32_1 = arith.constant 0 : i32
    return %c0_i32, %c0_i32_0 : i32, i32
  }
  func.func @transform_8(%arg0: i32, %arg1: i32) -> (i32, i32, i32) {
    %c0_i32 = arith.constant 0 : i32
    %c0_i32_0 = arith.constant 0 : i32
    return %arg0, %c0_i32, %arg1 : i32, i32, i32
  }
}

</mosaic_0001>

<llo_original>
// kernel: normal_prediction_forward.1
$region0: #{normal_prediction_forward.1}
  #allocation0 [shape = 'u32[]', space=smem, size = 0x4, offset = 0x4, fixed_abs, tag = 'smem constant byte address 0x4 - core index']
  #allocation1 [shape = 'u32[144,128]{1,0:T(1,128)}', space=vmem, size = 0x12000, scoped, tag = 'internal scratch']
  %s0 = inlined_call_operand.vmem [shape: f32[2,16,1024], index: 0, kind: input, shape index: {}]
  %s1 = inlined_call_operand.vmem [shape: f32[256,16], index: 1, kind: input, shape index: {}]
  %s2 = inlined_call_operand.vmem [shape: f32[256,1], index: 2, kind: input, shape index: {}]
  %s3 = inlined_call_operand.vmem [shape: bf16[256,256], index: 3, kind: input, shape index: {}]
  %s4 = inlined_call_operand.vmem [shape: f32[256,1], index: 4, kind: input, shape index: {}]
  %s5 = inlined_call_operand.vmem [shape: bf16[128,256], index: 5, kind: input, shape index: {}]
  %s6 = inlined_call_operand.vmem [shape: f32[128,1], index: 6, kind: input, shape index: {}]
  %s7 = inlined_call_operand.vmem [shape: bf16[8,128], index: 7, kind: input, shape index: {}]
  %s8 = inlined_call_operand.vmem [shape: f32[2,8,1024], index: 8, kind: output, shape index: {}]
  %s9 = sld [smem:[#allocation0]]
  $region88: #{normal_prediction_forward.1} parent=0
    _
  %s11 = ssub.s32 1, %s9
  %s12 = scalar_select 0, %s11, %s9
  $region1: #{normal_prediction_forward.1} parent=0
    #allocation2 [shape = 'u8[65536]{0}', space=vmem, size = 0x10000, scoped, tag = 'input window, operand 0']
    loop: start=0, step=1, limit=6
    $region2: #{normal_prediction_forward.1} parent=1 // loop_pre_header
      _
    $region3: #{normal_prediction_forward.1} parent=1 // loop_header
      %s14 = sphi 0, %s18
      %p15 = scmp.ge.s32.totalorder %s14, 6
      %s21 = sphi 0, %s33
      %s22 = sphi 0, %s29
      %s23 = sphi 0, %s21
      %s24 = sphi 0, %s22
      %s25 = sphi 0, %s23
      %s26 = sphi 0, %s24
      %s38 = sphi 0, %s40
      %s41 = sphi 0, %s38
      %s42 = sphi 0, %s41
      %s58 = sphi 0, %s42
      %s62 = sphi 0, %s62
      %s64 = sphi 0, %s62
      %s65 = sphi 0, %s64
      %s79 = sphi 0, %s65
      %s83 = sphi 0, %s83
      %s85 = sphi 0, %s83
      %s86 = sphi 0, %s85
      %s100 = sphi 0, %s86
      %s104 = sphi 0, %s104
      %s106 = sphi 0, %s104
      %s107 = sphi 0, %s106
      %s121 = sphi 0, %s107
      %s125 = sphi 0, %s125
      %s127 = sphi 0, %s125
      %s128 = sphi 0, %s127
      %s142 = sphi 0, %s128
      %s146 = sphi 0, %s146
      %s148 = sphi 0, %s146
      %s149 = sphi 0, %s148
      %s163 = sphi 0, %s149
      %s167 = sphi 0, %s167
      %s169 = sphi 0, %s167
      %s170 = sphi 0, %s169
      %s184 = sphi 0, %s170
      %s188 = sphi 0, %s188
      %s190 = sphi 0, %s188
      %s191 = sphi 0, %s190
      %s205 = sphi 0, %s191
      %s213 = sphi 0, %s215
      %s216 = sphi 0, %s213
      %s217 = sphi 0, %s216
      %s233 = sphi 0, %s217
    $region4: #{normal_prediction_forward.1} parent=1 // loop_header_branch
      %17 = sbr.rel (%p15) target = $region8
    $region5: #{normal_prediction_forward.1} parent=1 // loop_body
      %s19 = ssub.s32 %s14, 1
      %s20 = ssub.s32 %s14, 2
      %s27 = sadd.s32 1, %s22
      %p28 = scmp.ge.s32.totalorder %s27, 2
      %s29 = scalar_select %p28, 0, %s27
      %s30 = sadd.s32 1, %s21
      %s31 = scalar_select %p28, %s30, %s21
      %p32 = scmp.ge.s32.totalorder %s31, 2
      %s33 = scalar_select %p32, 0, %s31
      %s34 = ssub.s32 %s21, %s33
      %s35 = ssub.s32 %s22, %s29
      %s36 = sor.u32 %s34, %s35
      %p37 = scmp.eq.s32.totalorder %s36, 0
      %s39 = sadd.s32 %s38, 1
      %s40 = scalar_select %p37, %s38, %s39
      %p43 = pneg %p37
      %p44 = scmp.eq.s32.totalorder %s14, 3
      %p45 = por %p43, %p44
      %p46 = scmp.ne.s32.totalorder %s38, %s41
      %p47 = scmp.eq.s32.totalorder %s14, 0
      %p48 = por %p46, %p47
      %p49 = scmp.ne.s32.totalorder %s38, %s41
      %p50 = scmp.eq.s32.totalorder %s19, 3
      %p51 = por %p49, %p50
      %p52 = scmp.ne.s32.totalorder %s41, %s42
      %p53 = scmp.eq.s32.totalorder %s19, 0
      %p54 = por %p52, %p53
      %p55 = scmp.ne.s32.totalorder %s41, %s42
      %p56 = scmp.eq.s32.totalorder %s20, 3
      %p57 = por %p55, %p56
      %p59 = scmp.ne.s32.totalorder %s42, %s58
      %p60 = scmp.eq.s32.totalorder %s20, 0
      %p61 = por %p59, %p60
      %s63 = sadd.s32 %s62, 1
      %p66 = scmp.eq.s32.totalorder %s14, 3
      %p67 = scmp.ne.s32.totalorder %s62, %s64
      %p68 = scmp.eq.s32.totalorder %s14, 0
      %p69 = por %p67, %p68
      %p70 = scmp.ne.s32.totalorder %s62, %s64
      %p71 = scmp.eq.s32.totalorder %s19, 3
      %p72 = por %p70, %p71
      %p73 = scmp.ne.s32.totalorder %s64, %s65
      %p74 = scmp.eq.s32.totalorder %s19, 0
      %p75 = por %p73, %p74
      %p76 = scmp.ne.s32.totalorder %s64, %s65
      %p77 = scmp.eq.s32.totalorder %s20, 3
      %p78 = por %p76, %p77
      %p80 = scmp.ne.s32.totalorder %s65, %s79
      %p81 = scmp.eq.s32.totalorder %s20, 0
      %p82 = por %p80, %p81
      %s84 = sadd.s32 %s83, 1
      %p87 = scmp.eq.s32.totalorder %s14, 3
      %p88 = scmp.ne.s32.totalorder %s83, %s85
      %p89 = scmp.eq.s32.totalorder %s14, 0
      %p90 = por %p88, %p89
      %p91 = scmp.ne.s32.totalorder %s83, %s85
      %p92 = scmp.eq.s32.totalorder %s19, 3
      %p93 = por %p91, %p92
      %p94 = scmp.ne.s32.totalorder %s85, %s86
      %p95 = scmp.eq.s32.totalorder %s19, 0
      %p96 = por %p94, %p95
      %p97 = scmp.ne.s32.totalorder %s85, %s86
      %p98 = scmp.eq.s32.totalorder %s20, 3
      %p99 = por %p97, %p98
      %p101 = scmp.ne.s32.totalorder %s86, %s100
      %p102 = scmp.eq.s32.totalorder %s20, 0
      %p103 = por %p101, %p102
      %s105 = sadd.s32 %s104, 1
      %p108 = scmp.eq.s32.totalorder %s14, 3
      %p109 = scmp.ne.s32.totalorder %s104, %s106
      %p110 = scmp.eq.s32.totalorder %s14, 0
      %p111 = por %p109, %p110
      %p112 = scmp.ne.s32.totalorder %s104, %s106
      %p113 = scmp.eq.s32.totalorder %s19, 3
      %p114 = por %p112, %p113
      %p115 = scmp.ne.s32.totalorder %s106, %s107
      %p116 = scmp.eq.s32.totalorder %s19, 0
      %p117 = por %p115, %p116
      %p118 = scmp.ne.s32.totalorder %s106, %s107
      %p119 = scmp.eq.s32.totalorder %s20, 3
      %p120 = por %p118, %p119
      %p122 = scmp.ne.s32.totalorder %s107, %s121
      %p123 = scmp.eq.s32.totalorder %s20, 0
      %p124 = por %p122, %p123
      %s126 = sadd.s32 %s125, 1
      %p129 = scmp.eq.s32.totalorder %s14, 3
      %p130 = scmp.ne.s32.totalorder %s125, %s127
      %p131 = scmp.eq.s32.totalorder %s14, 0
      %p132 = por %p130, %p131
      %p133 = scmp.ne.s32.totalorder %s125, %s127
      %p134 = scmp.eq.s32.totalorder %s19, 3
      %p135 = por %p133, %p134
      %p136 = scmp.ne.s32.totalorder %s127, %s128
      %p137 = scmp.eq.s32.totalorder %s19, 0
      %p138 = por %p136, %p137
      %p139 = scmp.ne.s32.totalorder %s127, %s128
      %p140 = scmp.eq.s32.totalorder %s20, 3
      %p141 = por %p139, %p140
      %p143 = scmp.ne.s32.totalorder %s128, %s142
      %p144 = scmp.eq.s32.totalorder %s20, 0
      %p145 = por %p143, %p144
      %s147 = sadd.s32 %s146, 1
      %p150 = scmp.eq.s32.totalorder %s14, 3
      %p151 = scmp.ne.s32.totalorder %s146, %s148
      %p152 = scmp.eq.s32.totalorder %s14, 0
      %p153 = por %p151, %p152
      %p154 = scmp.ne.s32.totalorder %s146, %s148
      %p155 = scmp.eq.s32.totalorder %s19, 3
      %p156 = por %p154, %p155
      %p157 = scmp.ne.s32.totalorder %s148, %s149
      %p158 = scmp.eq.s32.totalorder %s19, 0
      %p159 = por %p157, %p158
      %p160 = scmp.ne.s32.totalorder %s148, %s149
      %p161 = scmp.eq.s32.totalorder %s20, 3
      %p162 = por %p160, %p161
      %p164 = scmp.ne.s32.totalorder %s149, %s163
      %p165 = scmp.eq.s32.totalorder %s20, 0
      %p166 = por %p164, %p165
      %s168 = sadd.s32 %s167, 1
      %p171 = scmp.eq.s32.totalorder %s14, 3
      %p172 = scmp.ne.s32.totalorder %s167, %s169
      %p173 = scmp.eq.s32.totalorder %s14, 0
      %p174 = por %p172, %p173
      %p175 = scmp.ne.s32.totalorder %s167, %s169
      %p176 = scmp.eq.s32.totalorder %s19, 3
      %p177 = por %p175, %p176
      %p178 = scmp.ne.s32.totalorder %s169, %s170
      %p179 = scmp.eq.s32.totalorder %s19, 0
      %p180 = por %p178, %p179
      %p181 = scmp.ne.s32.totalorder %s169, %s170
      %p182 = scmp.eq.s32.totalorder %s20, 3
      %p183 = por %p181, %p182
      %p185 = scmp.ne.s32.totalorder %s170, %s184
      %p186 = scmp.eq.s32.totalorder %s20, 0
      %p187 = por %p185, %p186
      %s189 = sadd.s32 %s188, 1
      %p192 = scmp.eq.s32.totalorder %s14, 3
      %p193 = scmp.ne.s32.totalorder %s188, %s190
      %p194 = scmp.eq.s32.totalorder %s14, 0
      %p195 = por %p193, %p194
      %p196 = scmp.ne.s32.totalorder %s188, %s190
      %p197 = scmp.eq.s32.totalorder %s19, 3
      %p198 = por %p196, %p197
      %p199 = scmp.ne.s32.totalorder %s190, %s191
      %p200 = scmp.eq.s32.totalorder %s19, 0
      %p201 = por %p199, %p200
      %p202 = scmp.ne.s32.totalorder %s190, %s191
      %p203 = scmp.eq.s32.totalorder %s20, 3
      %p204 = por %p202, %p203
      %p206 = scmp.ne.s32.totalorder %s191, %s205
      %p207 = scmp.eq.s32.totalorder %s20, 0
      %p208 = por %p206, %p207
      %s209 = ssub.s32 %s21, %s33
      %s210 = ssub.s32 %s22, %s29
      %s211 = sor.u32 %s209, %s210
      %p212 = scmp.eq.s32.totalorder %s211, 0
      %s214 = sadd.s32 %s213, 1
      %s215 = scalar_select %p212, %s213, %s214
      %p218 = pneg %p212
      %p219 = scmp.eq.s32.totalorder %s14, 3
      %p220 = por %p218, %p219
      %p221 = scmp.ne.s32.totalorder %s213, %s216
      %p222 = scmp.eq.s32.totalorder %s14, 0
      %p223 = por %p221, %p222
      %p224 = scmp.ne.s32.totalorder %s213, %s216
      %p225 = scmp.eq.s32.totalorder %s19, 3
      %p226 = por %p224, %p225
      %p227 = scmp.ne.s32.totalorder %s216, %s217
      %p228 = scmp.eq.s32.totalorder %s19, 0
      %p229 = por %p227, %p228
      %p230 = scmp.ne.s32.totalorder %s216, %s217
      %p231 = scmp.eq.s32.totalorder %s20, 3
      %p232 = por %p230, %p231
      %p234 = scmp.ne.s32.totalorder %s217, %s233
      %p235 = scmp.eq.s32.totalorder %s20, 0
      %p236 = por %p234, %p235
      %p237 = scmp.le.s32.totalorder 1, %s14
      %p238 = scmp.lt.s32.totalorder %s14, 5
      %p239 = pnand %p237, %p238
      %p240 = pneg %p239
      // Predicated region
      $region9: #{normal_prediction_forward.1} parent=5 // pred_check
        _
      $region10: #{normal_prediction_forward.1} parent=5 // pred_check_branch
        %242 = sbr.rel (%p239) target = $region12
      $region11: #{normal_prediction_forward.1} parent=5 // pred_region
        %s243 = ssub.s32 %s14, 1
        // Predicated region
        $region13: #{normal_prediction_forward.1} parent=11 // pred_check
          %p244 = pneg %p75
        $region14: #{normal_prediction_forward.1} parent=11 // pred_check_branch
          %246 = sbr.rel (%p244) target = $region16
        $region15: #{normal_prediction_forward.1} parent=11 // pred_region
          _
        $region16: #{normal_prediction_forward.1} parent=11 // pred_fallthru
          _
        // Predicated region
        $region17: #{normal_prediction_forward.1} parent=11 // pred_check
          %p247 = pneg %p96
        $region18: #{normal_prediction_forward.1} parent=11 // pred_check_branch
          %249 = sbr.rel (%p247) target = $region20
        $region19: #{normal_prediction_forward.1} parent=11 // pred_region
          _
        $region20: #{normal_prediction_forward.1} parent=11 // pred_fallthru
          _
        // Predicated region
        $region21: #{normal_prediction_forward.1} parent=11 // pred_check
          %p250 = pneg %p117
        $region22: #{normal_prediction_forward.1} parent=11 // pred_check_branch
          %252 = sbr.rel (%p250) target = $region24
        $region23: #{normal_prediction_forward.1} parent=11 // pred_region
          _
        $region24: #{normal_prediction_forward.1} parent=11 // pred_fallthru
          _
        // Predicated region
        $region25: #{normal_prediction_forward.1} parent=11 // pred_check
          %p253 = pneg %p138
        $region26: #{normal_prediction_forward.1} parent=11 // pred_check_branch
          %255 = sbr.rel (%p253) target = $region28
        $region27: #{normal_prediction_forward.1} parent=11 // pred_region
          _
        $region28: #{normal_prediction_forward.1} parent=11 // pred_fallthru
          _
        // Predicated region
        $region29: #{normal_prediction_forward.1} parent=11 // pred_check
          %p256 = pneg %p159
        $region30: #{normal_prediction_forward.1} parent=11 // pred_check_branch
          %258 = sbr.rel (%p256) target = $region32
        $region31: #{normal_prediction_forward.1} parent=11 // pred_region
          _
        $region32: #{normal_prediction_forward.1} parent=11 // pred_fallthru
          _
        // Predicated region
        $region33: #{normal_prediction_forward.1} parent=11 // pred_check
          %p259 = pneg %p180
        $region34: #{normal_prediction_forward.1} parent=11 // pred_check_branch
          %261 = sbr.rel (%p259) target = $region36
        $region35: #{normal_prediction_forward.1} parent=11 // pred_region
          _
        $region36: #{normal_prediction_forward.1} parent=11 // pred_fallthru
          _
        // Predicated region
        $region37: #{normal_prediction_forward.1} parent=11 // pred_check
          %p262 = pneg %p201
        $region38: #{normal_prediction_forward.1} parent=11 // pred_check_branch
          %264 = sbr.rel (%p262) target = $region40
        $region39: #{normal_prediction_forward.1} parent=11 // pred_region
          _
        $region40: #{normal_prediction_forward.1} parent=11 // pred_fallthru
          _
      $region12: #{normal_prediction_forward.1} parent=5 // pred_fallthru
        _
      %p265 = scmp.lt.s32.totalorder %s14, 4
      // Predicated region
      $region41: #{normal_prediction_forward.1} parent=5 // pred_check
        %p266 = pneg %p265
      $region42: #{normal_prediction_forward.1} parent=5 // pred_check_branch
        %268 = sbr.rel (%p266) target = $region44
      $region43: #{normal_prediction_forward.1} parent=5 // pred_region
        // Predicated region
        $region45: #{normal_prediction_forward.1} parent=43 // pred_check
          %p269 = pneg %p48
        $region46: #{normal_prediction_forward.1} parent=43 // pred_check_branch
          %271 = sbr.rel (%p269) target = $region48
        $region47: #{normal_prediction_forward.1} parent=43 // pred_region
          %s272 = sand.u32 %s38, 1
          %s273 = sand.u32 %s38, 1
          %s274 = smul.addr %s273, 64
          %s275 = scalar_lea.vmem [#allocation2], %s274
          %s276 = smul.u32 4, %s22
          %s277 = smul.addr %s21, 16
          %s278 = sadd.s32 %s276, %s277
          %s279 = smul.addr %s278, 8
          %s280 = scalar_lea.vmem %s0, %s279
          // Predicated region
          $region49: #{normal_prediction_forward.1} parent=47 // pred_check
            _
          $region50: #{normal_prediction_forward.1} parent=47 // pred_check_branch
            %282 = sbr.rel (0) target = $region52
          $region51: #{normal_prediction_forward.1} parent=47 // pred_region
            // Predicated region
            $region53: #{normal_prediction_forward.1} parent=51 // pred_check
              _
            $region54: #{normal_prediction_forward.1} parent=51 // pred_check_branch
              %284 = sbr.rel (0) target = $region56
            $region55: #{normal_prediction_forward.1} parent=51 // pred_region
              loop: start=0, step=1, limit=1
              $region57: #{normal_prediction_forward.1} parent=55 // loop_pre_header
                _
              $region58: #{normal_prediction_forward.1} parent=55 // loop_header
                %s286 = sphi 0, %s290
                %p287 = scmp.ge.s32.totalorder %s286, 1
                %s291 = sphi %s280, %s280
                %s292 = sphi %s275, %s275
              $region59: #{normal_prediction_forward.1} parent=55 // loop_header_branch
                %289 = sbr.rel (%p287) target = $region63
              $region60: #{normal_prediction_forward.1} parent=55 // loop_body
                %v293 = vld [vmem:[%s291] sm:$0xff]
                %294 = vst [vmem:[%s292] sm:$0xff] %v293
                %v295 = vld [vmem:[%s291 + $0x8] sm:$0xff]
                %296 = vst [vmem:[%s292 + $0x8] sm:$0xff] %v295
                %v297 = vld [vmem:[%s291 + $0x10] sm:$0xff]
                %298 = vst [vmem:[%s292 + $0x10] sm:$0xff] %v297
                %v299 = vld [vmem:[%s291 + $0x18] sm:$0xff]
                %300 = vst [vmem:[%s292 + $0x18] sm:$0xff] %v299
                %v301 = vld [vmem:[%s291 + $0x40] sm:$0xff]
                %302 = vst [vmem:[%s292 + $0x20] sm:$0xff] %v301
                %v303 = vld [vmem:[%s291 + $0x48] sm:$0xff]
                %304 = vst [vmem:[%s292 + $0x28] sm:$0xff] %v303
                %v305 = vld [vmem:[%s291 + $0x50] sm:$0xff]
                %306 = vst [vmem:[%s292 + $0x30] sm:$0xff] %v305
                %v307 = vld [vmem:[%s291 + $0x58] sm:$0xff]
                %308 = vst [vmem:[%s292 + $0x38] sm:$0xff] %v307
              $region61: #{normal_prediction_forward.1} parent=55 // loop_footer
                %s290 = sadd.s32 1, %s286
              $region62: #{normal_prediction_forward.1} parent=55 // loop_footer_branch
                %285 = sbr.rel target = $region58
              $region63: #{normal_prediction_forward.1} parent=55 // loop_exit
                _
            $region56: #{normal_prediction_forward.1} parent=51 // pred_fallthru
              _
            // Predicated region
            $region64: #{normal_prediction_forward.1} parent=51 // pred_check
              _
            $region65: #{normal_prediction_forward.1} parent=51 // pred_check_branch
              %310 = sbr.rel target = $region67
            $region66: #{normal_prediction_forward.1} parent=51 // pred_region
              _
            $region67: #{normal_prediction_forward.1} parent=51 // pred_fallthru
              _
          $region52: #{normal_prediction_forward.1} parent=47 // pred_fallthru
            _
          %311 = vnop
        $region48: #{normal_prediction_forward.1} parent=43 // pred_fallthru
          _
      $region44: #{normal_prediction_forward.1} parent=5 // pred_fallthru
        _
      %p312 = scmp.le.s32.totalorder 1, %s14
      %p313 = scmp.lt.s32.totalorder %s14, 5
      %p314 = pnand %p312, %p313
      %p315 = pneg %p314
      // Predicated region
      $region68: #{normal_prediction_forward.1} parent=5 // pred_check
        _
      $region69: #{normal_prediction_forward.1} parent=5 // pred_check_branch
        %317 = sbr.rel (%p314) target = $region71
      $region70: #{normal_prediction_forward.1} parent=5 // pred_region
        %s318 = ssub.s32 %s14, 1
        %s319 = sand.u32 %s41, 1
        %s320 = sand.u32 %s41, 1
        %s321 = smul.addr %s320, 64
        %s322 = scalar_lea.vmem [#allocation2], %s321
        // Predicated region
        $region72: #{normal_prediction_forward.1} parent=70 // pred_check
          %p323 = pneg %p54
        $region73: #{normal_prediction_forward.1} parent=70 // pred_check_branch
          %325 = sbr.rel (%p323) target = $region75
        $region74: #{normal_prediction_forward.1} parent=70 // pred_region
          _
        $region75: #{normal_prediction_forward.1} parent=70 // pred_fallthru
          _
        %s326 = sand.u32 %s41, 1
        %s327 = sand.u32 %s41, 1
        %s328 = smul.addr %s327, 64
        %s329 = scalar_lea.vmem [#allocation2], %s328
        %p330 = pneg %p54
        %p331 = pneg %p51
        %p332 = pneg %p75
        %p333 = pneg %p72
        %p334 = pneg %p96
        %p335 = pneg %p93
        %p336 = pneg %p117
        %p337 = pneg %p114
        %p338 = pneg %p138
        %p339 = pneg %p135
        %p340 = pneg %p159
        %p341 = pneg %p156
        %p342 = pneg %p180
        %p343 = pneg %p177
        %p344 = pneg %p201
        %p345 = pneg %p198
        %p346 = pneg %p229
        %p347 = pneg %p226
        %s348 = smul.u32 4, %s24
        %p349 = scmp.lt.s32.totalorder %s23, 1
        %s350 = scalar_select %p349, %s23, 1
        %p351 = scmp.lt.s32.totalorder %s348, 7
        %s352 = scalar_select %p351, %s348, 7
        %s353 = smul.addr %s350, 8
        %s354 = sadd.s32 %s352, %s353
        %s355 = smul.addr %s354, 8
        %s356 = scalar_lea.vmem %s8, %s355
        %s357 = smul.u32 4, %s24
        %s358 = smul.u32 4, %s24
        %p359 = scmp.lt.s32.totalorder %s23, 1
        %s360 = scalar_select %p359, %s23, 1
        %p361 = scmp.lt.s32.totalorder %s358, 7
        %s362 = scalar_select %p361, %s358, 7
        %s363 = smul.addr %s360, 8
        %s364 = sadd.s32 %s362, %s363
        %s365 = smul.addr %s364, 8
        %s366 = scalar_lea.vmem %s8, %s365
        %s367 = smul.u32 4, %s24
        %v369 = vld [vmem:[%s322] sm:$0xff]
        %v370 = vld [vmem:[%s322 + $0x8] sm:$0xff]
        %v371 = vld [vmem:[%s322 + $0x10] sm:$0xff]
        %v372 = vld [vmem:[%s322 + $0x18] sm:$0xff]
        %v373 = vld [vmem:[%s322 + $0x20] sm:$0xff]
        %v374 = vld [vmem:[%s322 + $0x28] sm:$0xff]
        %v375 = vld [vmem:[%s322 + $0x30] sm:$0xff]
        %v376 = vld [vmem:[%s322 + $0x38] sm:$0xff]
        %v377 = vld [vmem:[%s1] sm:$0xff]
        %v378 = vld [vmem:[%s1 + $0x8] sm:$0xff]
        %v379 = vld [vmem:[%s1 + $0x10] sm:$0xff]
        %v380 = vld [vmem:[%s1 + $0x18] sm:$0xff]
        %v381 = vld [vmem:[%s1 + $0x20] sm:$0xff]
        %v382 = vld [vmem:[%s1 + $0x28] sm:$0xff]
        %v383 = vld [vmem:[%s1 + $0x30] sm:$0xff]
        %v384 = vld [vmem:[%s1 + $0x38] sm:$0xff]
        %v385 = vld [vmem:[%s1 + $0x40] sm:$0xff]
        %v386 = vld [vmem:[%s1 + $0x48] sm:$0xff]
        %v387 = vld [vmem:[%s1 + $0x50] sm:$0xff]
        %v388 = vld [vmem:[%s1 + $0x58] sm:$0xff]
        %v389 = vld [vmem:[%s1 + $0x60] sm:$0xff]
        %v390 = vld [vmem:[%s1 + $0x68] sm:$0xff]
        %v391 = vld [vmem:[%s1 + $0x70] sm:$0xff]
        %v392 = vld [vmem:[%s1 + $0x78] sm:$0xff]
        %v393 = vld [vmem:[%s1 + $0x80] sm:$0xff]
        %v394 = vld [vmem:[%s1 + $0x88] sm:$0xff]
        %v395 = vld [vmem:[%s1 + $0x90] sm:$0xff]
        %v396 = vld [vmem:[%s1 + $0x98] sm:$0xff]
        %v397 = vld [vmem:[%s1 + $0xa0] sm:$0xff]
        %v398 = vld [vmem:[%s1 + $0xa8] sm:$0xff]
        %v399 = vld [vmem:[%s1 + $0xb0] sm:$0xff]
        %v400 = vld [vmem:[%s1 + $0xb8] sm:$0xff]
        %v401 = vld [vmem:[%s1 + $0xc0] sm:$0xff]
        %v402 = vld [vmem:[%s1 + $0xc8] sm:$0xff]
        %v403 = vld [vmem:[%s1 + $0xd0] sm:$0xff]
        %v404 = vld [vmem:[%s1 + $0xd8] sm:$0xff]
        %v405 = vld [vmem:[%s1 + $0xe0] sm:$0xff]
        %v406 = vld [vmem:[%s1 + $0xe8] sm:$0xff]
        %v407 = vld [vmem:[%s1 + $0xf0] sm:$0xff]
        %v408 = vld [vmem:[%s1 + $0xf8] sm:$0xff]
        %v409 = vld [vmem:[%s2] sm:$0xff]
        %v410 = vld [vmem:[%s2 + $0x8] sm:$0xff]
        %v411 = vld [vmem:[%s2 + $0x10] sm:$0xff]
        %v412 = vld [vmem:[%s2 + $0x18] sm:$0xff]
        %v413 = vld [vmem:[%s2 + $0x20] sm:$0xff]
        %v414 = vld [vmem:[%s2 + $0x28] sm:$0xff]
        %v415 = vld [vmem:[%s2 + $0x30] sm:$0xff]
        %v416 = vld [vmem:[%s2 + $0x38] sm:$0xff]
        %v417 = vld [vmem:[%s2 + $0x40] sm:$0xff]
        %v418 = vld [vmem:[%s2 + $0x48] sm:$0xff]
        %v419 = vld [vmem:[%s2 + $0x50] sm:$0xff]
        %v420 = vld [vmem:[%s2 + $0x58] sm:$0xff]
        %v421 = vld [vmem:[%s2 + $0x60] sm:$0xff]
        %v422 = vld [vmem:[%s2 + $0x68] sm:$0xff]
        %v423 = vld [vmem:[%s2 + $0x70] sm:$0xff]
        %v424 = vld [vmem:[%s2 + $0x78] sm:$0xff]
        %v425 = vld [vmem:[%s2 + $0x80] sm:$0xff]
        %v426 = vld [vmem:[%s2 + $0x88] sm:$0xff]
        %v427 = vld [vmem:[%s2 + $0x90] sm:$0xff]
        %v428 = vld [vmem:[%s2 + $0x98] sm:$0xff]
        %v429 = vld [vmem:[%s2 + $0xa0] sm:$0xff]
        %v430 = vld [vmem:[%s2 + $0xa8] sm:$0xff]
        %v431 = vld [vmem:[%s2 + $0xb0] sm:$0xff]
        %v432 = vld [vmem:[%s2 + $0xb8] sm:$0xff]
        %v433 = vld [vmem:[%s2 + $0xc0] sm:$0xff]
        %v434 = vld [vmem:[%s2 + $0xc8] sm:$0xff]
        %v435 = vld [vmem:[%s2 + $0xd0] sm:$0xff]
        %v436 = vld [vmem:[%s2 + $0xd8] sm:$0xff]
        %v437 = vld [vmem:[%s2 + $0xe0] sm:$0xff]
        %v438 = vld [vmem:[%s2 + $0xe8] sm:$0xff]
        %v439 = vld [vmem:[%s2 + $0xf0] sm:$0xff]
        %v440 = vld [vmem:[%s2 + $0xf8] sm:$0xff]
        %442 = vset.pattern.permute.xlu0 0
        %443 = vperm.xlu0 %442, %v409
        %v444 = vpop.permute.xlu0 %443
        %447 = vset.pattern.permute.xlu0 0
        %448 = vperm.xlu0 %447, %v410
        %v449 = vpop.permute.xlu0 %448
        %452 = vset.pattern.permute.xlu0 0
        %453 = vperm.xlu0 %452, %v411
        %v454 = vpop.permute.xlu0 %453
        %457 = vset.pattern.permute.xlu0 0
        %458 = vperm.xlu0 %457, %v412
        %v459 = vpop.permute.xlu0 %458
        %462 = vset.pattern.permute.xlu0 0
        %463 = vperm.xlu0 %462, %v413
        %v464 = vpop.permute.xlu0 %463
        %467 = vset.pattern.permute.xlu0 0
        %468 = vperm.xlu0 %467, %v414
        %v469 = vpop.permute.xlu0 %468
        %472 = vset.pattern.permute.xlu0 0
        %473 = vperm.xlu0 %472, %v415
        %v474 = vpop.permute.xlu0 %473
        %477 = vset.pattern.permute.xlu0 0
        %478 = vperm.xlu0 %477, %v416
        %v479 = vpop.permute.xlu0 %478
        %482 = vset.pattern.permute.xlu0 0
        %483 = vperm.xlu0 %482, %v417
        %v484 = vpop.permute.xlu0 %483
        %487 = vset.pattern.permute.xlu0 0
        %488 = vperm.xlu0 %487, %v418
        %v489 = vpop.permute.xlu0 %488
        %492 = vset.pattern.permute.xlu0 0
        %493 = vperm.xlu0 %492, %v419
        %v494 = vpop.permute.xlu0 %493
        %497 = vset.pattern.permute.xlu0 0
        %498 = vperm.xlu0 %497, %v420
        %v499 = vpop.permute.xlu0 %498
        %502 = vset.pattern.permute.xlu0 0
        %503 = vperm.xlu0 %502, %v421
        %v504 = vpop.permute.xlu0 %503
        %507 = vset.pattern.permute.xlu0 0
        %508 = vperm.xlu0 %507, %v422
        %v509 = vpop.permute.xlu0 %508
        %512 = vset.pattern.permute.xlu0 0
        %513 = vperm.xlu0 %512, %v423
        %v514 = vpop.permute.xlu0 %513
        %517 = vset.pattern.permute.xlu0 0
        %518 = vperm.xlu0 %517, %v424
        %v519 = vpop.permute.xlu0 %518
        %522 = vset.pattern.permute.xlu0 0
        %523 = vperm.xlu0 %522, %v425
        %v524 = vpop.permute.xlu0 %523
        %527 = vset.pattern.permute.xlu0 0
        %528 = vperm.xlu0 %527, %v426
        %v529 = vpop.permute.xlu0 %528
        %532 = vset.pattern.permute.xlu0 0
        %533 = vperm.xlu0 %532, %v427
        %v534 = vpop.permute.xlu0 %533
        %537 = vset.pattern.permute.xlu0 0
        %538 = vperm.xlu0 %537, %v428
        %v539 = vpop.permute.xlu0 %538
        %542 = vset.pattern.permute.xlu0 0
        %543 = vperm.xlu0 %542, %v429
        %v544 = vpop.permute.xlu0 %543
        %547 = vset.pattern.permute.xlu0 0
        %548 = vperm.xlu0 %547, %v430
        %v549 = vpop.permute.xlu0 %548
        %552 = vset.pattern.permute.xlu0 0
        %553 = vperm.xlu0 %552, %v431
        %v554 = vpop.permute.xlu0 %553
        %557 = vset.pattern.permute.xlu0 0
        %558 = vperm.xlu0 %557, %v432
        %v559 = vpop.permute.xlu0 %558
        %562 = vset.pattern.permute.xlu0 0
        %563 = vperm.xlu0 %562, %v433
        %v564 = vpop.permute.xlu0 %563
        %567 = vset.pattern.permute.xlu0 0
        %568 = vperm.xlu0 %567, %v434
        %v569 = vpop.permute.xlu0 %568
        %572 = vset.pattern.permute.xlu0 0
        %573 = vperm.xlu0 %572, %v435
        %v574 = vpop.permute.xlu0 %573
        %577 = vset.pattern.permute.xlu0 0
        %578 = vperm.xlu0 %577, %v436
        %v579 = vpop.permute.xlu0 %578
        %582 = vset.pattern.permute.xlu0 0
        %583 = vperm.xlu0 %582, %v437
        %v584 = vpop.permute.xlu0 %583
        %587 = vset.pattern.permute.xlu0 0
        %588 = vperm.xlu0 %587, %v438
        %v589 = vpop.permute.xlu0 %588
        %592 = vset.pattern.permute.xlu0 0
        %593 = vperm.xlu0 %592, %v439
        %v594 = vpop.permute.xlu0 %593
        %597 = vset.pattern.permute.xlu0 0
        %598 = vperm.xlu0 %597, %v440
        %v599 = vpop.permute.xlu0 %598
        %vm601 = vcmask 130048
        %v603 = vsel %vm601, %v377, 0
        %v606 = vsel %vm601, %v378, 0
        %v609 = vsel %vm601, %v379, 0
        %v612 = vsel %vm601, %v380, 0
        %v615 = vsel %vm601, %v381, 0
        %v618 = vsel %vm601, %v382, 0
        %v621 = vsel %vm601, %v383, 0
        %v624 = vsel %vm601, %v384, 0
        %v627 = vsel %vm601, %v385, 0
        %v630 = vsel %vm601, %v386, 0
        %v633 = vsel %vm601, %v387, 0
        %v636 = vsel %vm601, %v388, 0
        %v639 = vsel %vm601, %v389, 0
        %v642 = vsel %vm601, %v390, 0
        %v645 = vsel %vm601, %v391, 0
        %v648 = vsel %vm601, %v392, 0
        %v651 = vsel %vm601, %v393, 0
        %v654 = vsel %vm601, %v394, 0
        %v657 = vsel %vm601, %v395, 0
        %v660 = vsel %vm601, %v396, 0
        %v663 = vsel %vm601, %v397, 0
        %v666 = vsel %vm601, %v398, 0
        %v669 = vsel %vm601, %v399, 0
        %v672 = vsel %vm601, %v400, 0
        %v675 = vsel %vm601, %v401, 0
        %v678 = vsel %vm601, %v402, 0
        %v681 = vsel %vm601, %v403, 0
        %v684 = vsel %vm601, %v404, 0
        %v687 = vsel %vm601, %v405, 0
        %v690 = vsel %vm601, %v406, 0
        %v693 = vsel %vm601, %v407, 0
        %v696 = vsel %vm601, %v408, 0
        %698 = vmatprep.subr.mxu0 %v370
        %699 = vmatpush1.msra.mxu0 %v369
        %700 = vmatprep.subr.mxu0 %v374
        %701 = vmatpush1.msra.mxu0 %v373
        %702 = vmatprep.subr.mxu0 0.0
        %703 = vmatpush1.msra.mxu0 0.0
        %704 = vmatprep.subr.mxu0 0.0
        %705 = vmatpush1.msra.mxu0 0.0
        %706 = vmatprep.subr.mxu0 0.0
        %707 = vmatpush1.msra.mxu0 0.0
        %708 = vmatprep.subr.mxu0 0.0
        %709 = vmatpush1.msra.mxu0 0.0
        %710 = vmatprep.subr.mxu0 0.0
        %711 = vmatpush1.msra.mxu0 0.0
        %712 = vmatprep.subr.mxu0 0.0
        %713 = vmatpush1.msra.mxu0 0.0
        %714 = vmatprep.subr.mxu0 0.0
        %715 = vmatpush1.msra.mxu0 0.0
        %716 = vmatprep.subr.mxu0 0.0
        %717 = vmatpush1.msra.mxu0 0.0
        %718 = vmatprep.subr.mxu0 0.0
        %719 = vmatpush1.msra.mxu0 0.0
        %720 = vmatprep.subr.mxu0 0.0
        %721 = vmatpush1.msra.mxu0 0.0
        %722 = vmatprep.subr.mxu0 0.0
        %723 = vmatpush1.msra.mxu0 0.0
        %724 = vmatprep.subr.mxu0 0.0
        %725 = vmatpush1.msra.mxu0 0.0
        %726 = vmatprep.subr.mxu0 0.0
        %727 = vmatpush1.msra.mxu0 0.0
        %728 = vmatprep.subr.mxu0 0.0
        %729 = vmatpush1.msra.mxu0 0.0
        %730 = vmatprep.subr.mxu0 0.0
        %731 = vmatpush1.msra.mxu0 0.0
        %732 = vmatprep.subr.mxu0 0.0
        %733 = vmatpush1.msra.mxu0 0.0
        %734 = vmatprep.subr.mxu0 0.0
        %735 = vmatpush1.msra.mxu0 0.0
        %736 = vmatprep.subr.mxu0 0.0
        %737 = vmatpush1.msra.mxu0 0.0
        %738 = vmatprep.subr.mxu0 0.0
        %739 = vmatpush1.msra.mxu0 0.0
        %740 = vmatprep.subr.mxu0 0.0
        %741 = vmatpush1.msra.mxu0 0.0
        %742 = vmatprep.subr.mxu0 0.0
        %743 = vmatpush1.msra.mxu0 0.0
        %744 = vmatprep.subr.mxu0 0.0
        %745 = vmatpush1.msra.mxu0 0.0
        %746 = vmatprep.subr.mxu0 0.0
        %747 = vmatpush1.msra.mxu0 0.0
        %748 = vmatprep.subr.mxu0 0.0
        %749 = vmatpush1.msra.mxu0 0.0
        %750 = vmatprep.subr.mxu0 0.0
        %751 = vmatpush1.msra.mxu0 0.0
        %752 = vmatprep.subr.mxu0 0.0
        %753 = vmatpush1.msra.mxu0 0.0
        %754 = vmatprep.subr.mxu0 0.0
        %755 = vmatpush1.msra.mxu0 0.0
        %756 = vmatprep.subr.mxu0 0.0
        %757 = vmatpush1.msra.mxu0 0.0
        %758 = vmatprep.subr.mxu0 0.0
        %759 = vmatpush1.msra.mxu0 0.0
        %760 = vmatprep.subr.mxu0 0.0
        %761 = vmatpush1.msra.mxu0 0.0
        %762 = vmatprep.mubr.f32.mxu0 0.0
        %763 = vmatmul.mubr.f32.gmra.mrb[0].mxu0 %v603
        %v764 = vpop.f32.mrb[0].mxu0
        %v765 = vadd.f32 %v444, %v764
        %v766 = vpop.f32.mrb[0].mxu0
        %v767 = vadd.f32 %v444, %v766
        %768 = vmatprep.mubr.f32.mxu0 0.0
        %769 = vmatmul.mubr.f32.gmra.mrb[0].mxu0 %v606
        %v770 = vpop.f32.mrb[0].mxu0
        %v771 = vadd.f32 %v449, %v770
        %v772 = vpop.f32.mrb[0].mxu0
        %v773 = vadd.f32 %v449, %v772
        %774 = vmatprep.mubr.f32.mxu0 0.0
        %775 = vmatmul.mubr.f32.gmra.mrb[0].mxu0 %v609
        %v776 = vpop.f32.mrb[0].mxu0
        %v777 = vadd.f32 %v454, %v776
        %v778 = vpop.f32.mrb[0].mxu0
        %v779 = vadd.f32 %v454, %v778
        %780 = vmatprep.mubr.f32.mxu0 0.0
        %781 = vmatmul.mubr.f32.gmra.mrb[0].mxu0 %v612
        %v782 = vpop.f32.mrb[0].mxu0
        %v783 = vadd.f32 %v459, %v782
        %v784 = vpop.f32.mrb[0].mxu0
        %v785 = vadd.f32 %v459, %v784
        %786 = vmatprep.mubr.f32.mxu0 0.0
        %787 = vmatmul.mubr.f32.gmra.mrb[0].mxu0 %v615
        %v788 = vpop.f32.mrb[0].mxu0
        %v789 = vadd.f32 %v464, %v788
        %v790 = vpop.f32.mrb[0].mxu0
        %v791 = vadd.f32 %v464, %v790
        %792 = vmatprep.mubr.f32.mxu0 0.0
        %793 = vmatmul.mubr.f32.gmra.mrb[0].mxu0 %v618
        %v794 = vpop.f32.mrb[0].mxu0
        %v795 = vadd.f32 %v469, %v794
        %v796 = vpop.f32.mrb[0].mxu0
        %v797 = vadd.f32 %v469, %v796
        %798 = vmatprep.mubr.f32.mxu0 0.0
        %799 = vmatmul.mubr.f32.gmra.mrb[0].mxu0 %v621
        %v800 = vpop.f32.mrb[0].mxu0
        %v801 = vadd.f32 %v474, %v800
        %v802 = vpop.f32.mrb[0].mxu0
        %v803 = vadd.f32 %v474, %v802
        %804 = vmatprep.mubr.f32.mxu0 0.0
        %805 = vmatmul.mubr.f32.gmra.mrb[0].mxu0 %v624
        %v806 = vpop.f32.mrb[0].mxu0
        %v807 = vadd.f32 %v479, %v806
        %v808 = vpop.f32.mrb[0].mxu0
        %v809 = vadd.f32 %v479, %v808
        %810 = vmatprep.mubr.f32.mxu0 0.0
        %811 = vmatmul.mubr.f32.gmra.mrb[0].mxu0 %v627
        %v812 = vpop.f32.mrb[0].mxu0
        %v813 = vadd.f32 %v484, %v812
        %v814 = vpop.f32.mrb[0].mxu0
        %v815 = vadd.f32 %v484, %v814
        %816 = vmatprep.mubr.f32.mxu0 0.0
        %817 = vmatmul.mubr.f32.gmra.mrb[0].mxu0 %v630
        %v818 = vpop.f32.mrb[0].mxu0
        %v819 = vadd.f32 %v489, %v818
        %v820 = vpop.f32.mrb[0].mxu0
        %v821 = vadd.f32 %v489, %v820
        %822 = vmatprep.mubr.f32.mxu0 0.0
        %823 = vmatmul.mubr.f32.gmra.mrb[0].mxu0 %v633
        %v824 = vpop.f32.mrb[0].mxu0
        %v825 = vadd.f32 %v494, %v824
        %v826 = vpop.f32.mrb[0].mxu0
        %v827 = vadd.f32 %v494, %v826
        %828 = vmatprep.mubr.f32.mxu0 0.0
        %829 = vmatmul.mubr.f32.gmra.mrb[0].mxu0 %v636
        %v830 = vpop.f32.mrb[0].mxu0
        %v831 = vadd.f32 %v499, %v830
        %v832 = vpop.f32.mrb[0].mxu0
        %v833 = vadd.f32 %v499, %v832
        %834 = vmatprep.mubr.f32.mxu0 0.0
        %835 = vmatmul.mubr.f32.gmra.mrb[0].mxu0 %v639
        %v836 = vpop.f32.mrb[0].mxu0
        %v837 = vadd.f32 %v504, %v836
        %v838 = vpop.f32.mrb[0].mxu0
        %v839 = vadd.f32 %v504, %v838
        %840 = vmatprep.mubr.f32.mxu0 0.0
        %841 = vmatmul.mubr.f32.gmra.mrb[0].mxu0 %v642
        %v842 = vpop.f32.mrb[0].mxu0
        %v843 = vadd.f32 %v509, %v842
        %v844 = vpop.f32.mrb[0].mxu0
        %v845 = vadd.f32 %v509, %v844
        %846 = vmatprep.mubr.f32.mxu0 0.0
        %847 = vmatmul.mubr.f32.gmra.mrb[0].mxu0 %v645
        %v848 = vpop.f32.mrb[0].mxu0
        %v849 = vadd.f32 %v514, %v848
        %v850 = vpop.f32.mrb[0].mxu0
        %v851 = vadd.f32 %v514, %v850
        %852 = vmatprep.mubr.f32.mxu0 0.0
        %853 = vmatmul.mubr.f32.gmra.mrb[0].mxu0 %v648
        %v854 = vpop.f32.mrb[0].mxu0
        %v855 = vadd.f32 %v519, %v854
        %v856 = vpop.f32.mrb[0].mxu0
        %v857 = vadd.f32 %v519, %v856
        %858 = vmatprep.mubr.f32.mxu0 0.0
        %859 = vmatmul.mubr.f32.gmra.mrb[0].mxu0 %v651
        %v860 = vpop.f32.mrb[0].mxu0
        %v861 = vadd.f32 %v524, %v860
        %v862 = vpop.f32.mrb[0].mxu0
        %v863 = vadd.f32 %v524, %v862
        %864 = vmatprep.mubr.f32.mxu0 0.0
        %865 = vmatmul.mubr.f32.gmra.mrb[0].mxu0 %v654
        %v866 = vpop.f32.mrb[0].mxu0
        %v867 = vadd.f32 %v529, %v866
        %v868 = vpop.f32.mrb[0].mxu0
        %v869 = vadd.f32 %v529, %v868
        %870 = vmatprep.mubr.f32.mxu0 0.0
        %871 = vmatmul.mubr.f32.gmra.mrb[0].mxu0 %v657
        %v872 = vpop.f32.mrb[0].mxu0
        %v873 = vadd.f32 %v534, %v872
        %v874 = vpop.f32.mrb[0].mxu0
        %v875 = vadd.f32 %v534, %v874
        %876 = vmatprep.mubr.f32.mxu0 0.0
        %877 = vmatmul.mubr.f32.gmra.mrb[0].mxu0 %v660
        %v878 = vpop.f32.mrb[0].mxu0
        %v879 = vadd.f32 %v539, %v878
        %v880 = vpop.f32.mrb[0].mxu0
        %v881 = vadd.f32 %v539, %v880
        %882 = vmatprep.mubr.f32.mxu0 0.0
        %883 = vmatmul.mubr.f32.gmra.mrb[0].mxu0 %v663
        %v884 = vpop.f32.mrb[0].mxu0
        %v885 = vadd.f32 %v544, %v884
        %v886 = vpop.f32.mrb[0].mxu0
        %v887 = vadd.f32 %v544, %v886
        %888 = vmatprep.mubr.f32.mxu0 0.0
        %889 = vmatmul.mubr.f32.gmra.mrb[0].mxu0 %v666
        %v890 = vpop.f32.mrb[0].mxu0
        %v891 = vadd.f32 %v549, %v890
        %v892 = vpop.f32.mrb[0].mxu0
        %v893 = vadd.f32 %v549, %v892
        %894 = vmatprep.mubr.f32.mxu0 0.0
        %895 = vmatmul.mubr.f32.gmra.mrb[0].mxu0 %v669
        %v896 = vpop.f32.mrb[0].mxu0
        %v897 = vadd.f32 %v554, %v896
        %v898 = vpop.f32.mrb[0].mxu0
        %v899 = vadd.f32 %v554, %v898
        %900 = vmatprep.mubr.f32.mxu0 0.0
        %901 = vmatmul.mubr.f32.gmra.mrb[0].mxu0 %v672
        %v902 = vpop.f32.mrb[0].mxu0
        %v903 = vadd.f32 %v559, %v902
        %v904 = vpop.f32.mrb[0].mxu0
        %v905 = vadd.f32 %v559, %v904
        %906 = vmatprep.mubr.f32.mxu0 0.0
        %907 = vmatmul.mubr.f32.gmra.mrb[0].mxu0 %v675
        %v908 = vpop.f32.mrb[0].mxu0
        %v909 = vadd.f32 %v564, %v908
        %v910 = vpop.f32.mrb[0].mxu0
        %v911 = vadd.f32 %v564, %v910
        %912 = vmatprep.mubr.f32.mxu0 0.0
        %913 = vmatmul.mubr.f32.gmra.mrb[0].mxu0 %v678
        %v914 = vpop.f32.mrb[0].mxu0
        %v915 = vadd.f32 %v569, %v914
        %v916 = vpop.f32.mrb[0].mxu0
        %v917 = vadd.f32 %v569, %v916
        %918 = vmatprep.mubr.f32.mxu0 0.0
        %919 = vmatmul.mubr.f32.gmra.mrb[0].mxu0 %v681
        %v920 = vpop.f32.mrb[0].mxu0
        %v921 = vadd.f32 %v574, %v920
        %v922 = vpop.f32.mrb[0].mxu0
        %v923 = vadd.f32 %v574, %v922
        %924 = vmatprep.mubr.f32.mxu0 0.0
        %925 = vmatmul.mubr.f32.gmra.mrb[0].mxu0 %v684
        %v926 = vpop.f32.mrb[0].mxu0
        %v927 = vadd.f32 %v579, %v926
        %v928 = vpop.f32.mrb[0].mxu0
        %v929 = vadd.f32 %v579, %v928
        %930 = vmatprep.mubr.f32.mxu0 0.0
        %931 = vmatmul.mubr.f32.gmra.mrb[0].mxu0 %v687
        %v932 = vpop.f32.mrb[0].mxu0
        %v933 = vadd.f32 %v584, %v932
        %v934 = vpop.f32.mrb[0].mxu0
        %v935 = vadd.f32 %v584, %v934
        %936 = vmatprep.mubr.f32.mxu0 0.0
        %937 = vmatmul.mubr.f32.gmra.mrb[0].mxu0 %v690
        %v938 = vpop.f32.mrb[0].mxu0
        %v939 = vadd.f32 %v589, %v938
        %v940 = vpop.f32.mrb[0].mxu0
        %v941 = vadd.f32 %v589, %v940
        %942 = vmatprep.mubr.f32.mxu0 0.0
        %943 = vmatmul.mubr.f32.gmra.mrb[0].mxu0 %v693
        %v944 = vpop.f32.mrb[0].mxu0
        %v945 = vadd.f32 %v594, %v944
        %v946 = vpop.f32.mrb[0].mxu0
        %v947 = vadd.f32 %v594, %v946
        %948 = vmatprep.mubr.f32.mxu0 0.0
        %949 = vmatmul.mubr.f32.gmra.mrb[0].mxu0 %v696
        %v950 = vpop.f32.mrb[0].mxu0
        %v951 = vadd.f32 %v599, %v950
        %v952 = vpop.f32.mrb[0].mxu0
        %v953 = vadd.f32 %v599, %v952
        %954 = vdwg.mxu0
        %955 = vmatprep.subr.mxu0 %v372
        %956 = vmatpush1.msra.mxu0 %v371
        %957 = vmatprep.subr.mxu0 %v376
        %958 = vmatpush1.msra.mxu0 %v375
        %959 = vmatprep.subr.mxu0 0.0
        %960 = vmatpush1.msra.mxu0 0.0
        %961 = vmatprep.subr.mxu0 0.0
        %962 = vmatpush1.msra.mxu0 0.0
        %963 = vmatprep.subr.mxu0 0.0
        %964 = vmatpush1.msra.mxu0 0.0
        %965 = vmatprep.subr.mxu0 0.0
        %966 = vmatpush1.msra.mxu0 0.0
        %967 = vmatprep.subr.mxu0 0.0
        %968 = vmatpush1.msra.mxu0 0.0
        %969 = vmatprep.subr.mxu0 0.0
        %970 = vmatpush1.msra.mxu0 0.0
        %971 = vmatprep.subr.mxu0 0.0
        %972 = vmatpush1.msra.mxu0 0.0
        %973 = vmatprep.subr.mxu0 0.0
        %974 = vmatpush1.msra.mxu0 0.0
        %975 = vmatprep.subr.mxu0 0.0
        %976 = vmatpush1.msra.mxu0 0.0
        %977 = vmatprep.subr.mxu0 0.0
        %978 = vmatpush1.msra.mxu0 0.0
        %979 = vmatprep.subr.mxu0 0.0
        %980 = vmatpush1.msra.mxu0 0.0
        %981 = vmatprep.subr.mxu0 0.0
        %982 = vmatpush1.msra.mxu0 0.0
        %983 = vmatprep.subr.mxu0 0.0
        %984 = vmatpush1.msra.mxu0 0.0
        %985 = vmatprep.subr.mxu0 0.0
        %986 = vmatpush1.msra.mxu0 0.0
        %987 = vmatprep.subr.mxu0 0.0
        %988 = vmatpush1.msra.mxu0 0.0
        %989 = vmatprep.subr.mxu0 0.0
        %990 = vmatpush1.msra.mxu0 0.0
        %991 = vmatprep.subr.mxu0 0.0
        %992 = vmatpush1.msra.mxu0 0.0
        %993 = vmatprep.subr.mxu0 0.0
        %994 = vmatpush1.msra.mxu0 0.0
        %995 = vmatprep.subr.mxu0 0.0
        %996 = vmatpush1.msra.mxu0 0.0
        %997 = vmatprep.subr.mxu0 0.0
        %998 = vmatpush1.msra.mxu0 0.0
        %999 = vmatprep.subr.mxu0 0.0
        %1000 = vmatpush1.msra.mxu0 0.0
        %1001 = vmatprep.subr.mxu0 0.0
        %1002 = vmatpush1.msra.mxu0 0.0
        %1003 = vmatprep.subr.mxu0 0.0
        %1004 = vmatpush1.msra.mxu0 0.0
        %1005 = vmatprep.subr.mxu0 0.0
        %1006 = vmatpush1.msra.mxu0 0.0
        %1007 = vmatprep.subr.mxu0 0.0
        %1008 = vmatpush1.msra.mxu0 0.0
        %1009 = vmatprep.subr.mxu0 0.0
        %1010 = vmatpush1.msra.mxu0 0.0
        %1011 = vmatprep.subr.mxu0 0.0
        %1012 = vmatpush1.msra.mxu0 0.0
        %1013 = vmatprep.subr.mxu0 0.0
        %1014 = vmatpush1.msra.mxu0 0.0
        %1015 = vmatprep.subr.mxu0 0.0
        %1016 = vmatpush1.msra.mxu0 0.0
        %1017 = vmatprep.subr.mxu0 0.0
        %1018 = vmatpush1.msra.mxu0 0.0
        %1019 = vmatprep.mubr.f32.mxu0 0.0
        %1020 = vmatmul.mubr.f32.gmra.mrb[0].mxu0 %v603
        %v1021 = vpop.f32.mrb[0].mxu0
        %v1022 = vadd.f32 %v444, %v1021
        %v1023 = vpop.f32.mrb[0].mxu0
        %v1024 = vadd.f32 %v444, %v1023
        %1025 = vmatprep.mubr.f32.mxu0 0.0
        %1026 = vmatmul.mubr.f32.gmra.mrb[0].mxu0 %v606
        %v1027 = vpop.f32.mrb[0].mxu0
        %v1028 = vadd.f32 %v449, %v1027
        %v1029 = vpop.f32.mrb[0].mxu0
        %v1030 = vadd.f32 %v449, %v1029
        %1031 = vmatprep.mubr.f32.mxu0 0.0
        %1032 = vmatmul.mubr.f32.gmra.mrb[0].mxu0 %v609
        %v1033 = vpop.f32.mrb[0].mxu0
        %v1034 = vadd.f32 %v454, %v1033
        %v1035 = vpop.f32.mrb[0].mxu0
        %v1036 = vadd.f32 %v454, %v1035
        %1037 = vmatprep.mubr.f32.mxu0 0.0
        %1038 = vmatmul.mubr.f32.gmra.mrb[0].mxu0 %v612
        %v1039 = vpop.f32.mrb[0].mxu0
        %v1040 = vadd.f32 %v459, %v1039
        %v1041 = vpop.f32.mrb[0].mxu0
        %v1042 = vadd.f32 %v459, %v1041
        %1043 = vmatprep.mubr.f32.mxu0 0.0
        %1044 = vmatmul.mubr.f32.gmra.mrb[0].mxu0 %v615
        %v1045 = vpop.f32.mrb[0].mxu0
        %v1046 = vadd.f32 %v464, %v1045
        %v1047 = vpop.f32.mrb[0].mxu0
        %v1048 = vadd.f32 %v464, %v1047
        %1049 = vmatprep.mubr.f32.mxu0 0.0
        %1050 = vmatmul.mubr.f32.gmra.mrb[0].mxu0 %v618
        %v1051 = vpop.f32.mrb[0].mxu0
        %v1052 = vadd.f32 %v469, %v1051
        %v1053 = vpop.f32.mrb[0].mxu0
        %v1054 = vadd.f32 %v469, %v1053
        %1055 = vmatprep.mubr.f32.mxu0 0.0
        %1056 = vmatmul.mubr.f32.gmra.mrb[0].mxu0 %v621
        %v1057 = vpop.f32.mrb[0].mxu0
        %v1058 = vadd.f32 %v474, %v1057
        %v1059 = vpop.f32.mrb[0].mxu0
        %v1060 = vadd.f32 %v474, %v1059
        %1061 = vmatprep.mubr.f32.mxu0 0.0
        %1062 = vmatmul.mubr.f32.gmra.mrb[0].mxu0 %v624
        %v1063 = vpop.f32.mrb[0].mxu0
        %v1064 = vadd.f32 %v479, %v1063
        %v1065 = vpop.f32.mrb[0].mxu0
        %v1066 = vadd.f32 %v479, %v1065
        %1067 = vmatprep.mubr.f32.mxu0 0.0
        %1068 = vmatmul.mubr.f32.gmra.mrb[0].mxu0 %v627
        %v1069 = vpop.f32.mrb[0].mxu0
        %v1070 = vadd.f32 %v484, %v1069
        %v1071 = vpop.f32.mrb[0].mxu0
        %v1072 = vadd.f32 %v484, %v1071
        %1073 = vmatprep.mubr.f32.mxu0 0.0
        %1074 = vmatmul.mubr.f32.gmra.mrb[0].mxu0 %v630
        %v1075 = vpop.f32.mrb[0].mxu0
        %v1076 = vadd.f32 %v489, %v1075
        %v1077 = vpop.f32.mrb[0].mxu0
        %v1078 = vadd.f32 %v489, %v1077
        %1079 = vmatprep.mubr.f32.mxu0 0.0
        %1080 = vmatmul.mubr.f32.gmra.mrb[0].mxu0 %v633
        %v1081 = vpop.f32.mrb[0].mxu0
        %v1082 = vadd.f32 %v494, %v1081
        %v1083 = vpop.f32.mrb[0].mxu0
        %v1084 = vadd.f32 %v494, %v1083
        %1085 = vmatprep.mubr.f32.mxu0 0.0
        %1086 = vmatmul.mubr.f32.gmra.mrb[0].mxu0 %v636
        %v1087 = vpop.f32.mrb[0].mxu0
        %v1088 = vadd.f32 %v499, %v1087
        %v1089 = vpop.f32.mrb[0].mxu0
        %v1090 = vadd.f32 %v499, %v1089
        %1091 = vmatprep.mubr.f32.mxu0 0.0
        %1092 = vmatmul.mubr.f32.gmra.mrb[0].mxu0 %v639
        %v1093 = vpop.f32.mrb[0].mxu0
        %v1094 = vadd.f32 %v504, %v1093
        %v1095 = vpop.f32.mrb[0].mxu0
        %v1096 = vadd.f32 %v504, %v1095
        %1097 = vmatprep.mubr.f32.mxu0 0.0
        %1098 = vmatmul.mubr.f32.gmra.mrb[0].mxu0 %v642
        %v1099 = vpop.f32.mrb[0].mxu0
        %v1100 = vadd.f32 %v509, %v1099
        %v1101 = vpop.f32.mrb[0].mxu0
        %v1102 = vadd.f32 %v509, %v1101
        %1103 = vmatprep.mubr.f32.mxu0 0.0
        %1104 = vmatmul.mubr.f32.gmra.mrb[0].mxu0 %v645
        %v1105 = vpop.f32.mrb[0].mxu0
        %v1106 = vadd.f32 %v514, %v1105
        %v1107 = vpop.f32.mrb[0].mxu0
        %v1108 = vadd.f32 %v514, %v1107
        %1109 = vmatprep.mubr.f32.mxu0 0.0
        %1110 = vmatmul.mubr.f32.gmra.mrb[0].mxu0 %v648
        %v1111 = vpop.f32.mrb[0].mxu0
        %v1112 = vadd.f32 %v519, %v1111
        %v1113 = vpop.f32.mrb[0].mxu0
        %v1114 = vadd.f32 %v519, %v1113
        %1115 = vmatprep.mubr.f32.mxu0 0.0
        %1116 = vmatmul.mubr.f32.gmra.mrb[0].mxu0 %v651
        %v1117 = vpop.f32.mrb[0].mxu0
        %v1118 = vadd.f32 %v524, %v1117
        %v1119 = vpop.f32.mrb[0].mxu0
        %v1120 = vadd.f32 %v524, %v1119
        %1121 = vmatprep.mubr.f32.mxu0 0.0
        %1122 = vmatmul.mubr.f32.gmra.mrb[0].mxu0 %v654
        %v1123 = vpop.f32.mrb[0].mxu0
        %v1124 = vadd.f32 %v529, %v1123
        %v1125 = vpop.f32.mrb[0].mxu0
        %v1126 = vadd.f32 %v529, %v1125
        %1127 = vmatprep.mubr.f32.mxu0 0.0
        %1128 = vmatmul.mubr.f32.gmra.mrb[0].mxu0 %v657
        %v1129 = vpop.f32.mrb[0].mxu0
        %v1130 = vadd.f32 %v534, %v1129
        %v1131 = vpop.f32.mrb[0].mxu0
        %v1132 = vadd.f32 %v534, %v1131
        %1133 = vmatprep.mubr.f32.mxu0 0.0
        %1134 = vmatmul.mubr.f32.gmra.mrb[0].mxu0 %v660
        %v1135 = vpop.f32.mrb[0].mxu0
        %v1136 = vadd.f32 %v539, %v1135
        %v1137 = vpop.f32.mrb[0].mxu0
        %v1138 = vadd.f32 %v539, %v1137
        %1139 = vmatprep.mubr.f32.mxu0 0.0
        %1140 = vmatmul.mubr.f32.gmra.mrb[0].mxu0 %v663
        %v1141 = vpop.f32.mrb[0].mxu0
        %v1142 = vadd.f32 %v544, %v1141
        %v1143 = vpop.f32.mrb[0].mxu0
        %v1144 = vadd.f32 %v544, %v1143
        %1145 = vmatprep.mubr.f32.mxu0 0.0
        %1146 = vmatmul.mubr.f32.gmra.mrb[0].mxu0 %v666
        %v1147 = vpop.f32.mrb[0].mxu0
        %v1148 = vadd.f32 %v549, %v1147
        %v1149 = vpop.f32.mrb[0].mxu0
        %v1150 = vadd.f32 %v549, %v1149
        %1151 = vmatprep.mubr.f32.mxu0 0.0
        %1152 = vmatmul.mubr.f32.gmra.mrb[0].mxu0 %v669
        %v1153 = vpop.f32.mrb[0].mxu0
        %v1154 = vadd.f32 %v554, %v1153
        %v1155 = vpop.f32.mrb[0].mxu0
        %v1156 = vadd.f32 %v554, %v1155
        %1157 = vmatprep.mubr.f32.mxu0 0.0
        %1158 = vmatmul.mubr.f32.gmra.mrb[0].mxu0 %v672
        %v1159 = vpop.f32.mrb[0].mxu0
        %v1160 = vadd.f32 %v559, %v1159
        %v1161 = vpop.f32.mrb[0].mxu0
        %v1162 = vadd.f32 %v559, %v1161
        %1163 = vmatprep.mubr.f32.mxu0 0.0
        %1164 = vmatmul.mubr.f32.gmra.mrb[0].mxu0 %v675
        %v1165 = vpop.f32.mrb[0].mxu0
        %v1166 = vadd.f32 %v564, %v1165
        %v1167 = vpop.f32.mrb[0].mxu0
        %v1168 = vadd.f32 %v564, %v1167
        %1169 = vmatprep.mubr.f32.mxu0 0.0
        %1170 = vmatmul.mubr.f32.gmra.mrb[0].mxu0 %v678
        %v1171 = vpop.f32.mrb[0].mxu0
        %v1172 = vadd.f32 %v569, %v1171
        %v1173 = vpop.f32.mrb[0].mxu0
        %v1174 = vadd.f32 %v569, %v1173
        %1175 = vmatprep.mubr.f32.mxu0 0.0
        %1176 = vmatmul.mubr.f32.gmra.mrb[0].mxu0 %v681
        %v1177 = vpop.f32.mrb[0].mxu0
        %v1178 = vadd.f32 %v574, %v1177
        %v1179 = vpop.f32.mrb[0].mxu0
        %v1180 = vadd.f32 %v574, %v1179
        %1181 = vmatprep.mubr.f32.mxu0 0.0
        %1182 = vmatmul.mubr.f32.gmra.mrb[0].mxu0 %v684
        %v1183 = vpop.f32.mrb[0].mxu0
        %v1184 = vadd.f32 %v579, %v1183
        %v1185 = vpop.f32.mrb[0].mxu0
        %v1186 = vadd.f32 %v579, %v1185
        %1187 = vmatprep.mubr.f32.mxu0 0.0
        %1188 = vmatmul.mubr.f32.gmra.mrb[0].mxu0 %v687
        %v1189 = vpop.f32.mrb[0].mxu0
        %v1190 = vadd.f32 %v584, %v1189
        %v1191 = vpop.f32.mrb[0].mxu0
        %v1192 = vadd.f32 %v584, %v1191
        %1193 = vmatprep.mubr.f32.mxu0 0.0
        %1194 = vmatmul.mubr.f32.gmra.mrb[0].mxu0 %v690
        %v1195 = vpop.f32.mrb[0].mxu0
        %v1196 = vadd.f32 %v589, %v1195
        %v1197 = vpop.f32.mrb[0].mxu0
        %v1198 = vadd.f32 %v589, %v1197
        %1199 = vmatprep.mubr.f32.mxu0 0.0
        %1200 = vmatmul.mubr.f32.gmra.mrb[0].mxu0 %v693
        %v1201 = vpop.f32.mrb[0].mxu0
        %v1202 = vadd.f32 %v594, %v1201
        %v1203 = vpop.f32.mrb[0].mxu0
        %v1204 = vadd.f32 %v594, %v1203
        %1205 = vmatprep.mubr.f32.mxu0 0.0
        %1206 = vmatmul.mubr.f32.gmra.mrb[0].mxu0 %v696
        %v1207 = vpop.f32.mrb[0].mxu0
        %v1208 = vadd.f32 %v599, %v1207
        %v1209 = vpop.f32.mrb[0].mxu0
        %v1210 = vadd.f32 %v599, %v1209
        %1211 = vdwg.mxu0
        %v1212 = vmax.f32 %v765, 0.0
        %v1213 = vmax.f32 %v767, 0.0
        %v1214 = vmax.f32 %v1022, 0.0
        %v1215 = vmax.f32 %v1024, 0.0
        %v1216 = vmax.f32 %v771, 0.0
        %v1217 = vmax.f32 %v773, 0.0
        %v1218 = vmax.f32 %v1028, 0.0
        %v1219 = vmax.f32 %v1030, 0.0
        %v1220 = vmax.f32 %v777, 0.0
        %v1221 = vmax.f32 %v779, 0.0
        %v1222 = vmax.f32 %v1034, 0.0
        %v1223 = vmax.f32 %v1036, 0.0
        %v1224 = vmax.f32 %v783, 0.0
        %v1225 = vmax.f32 %v785, 0.0
        %v1226 = vmax.f32 %v1040, 0.0
        %v1227 = vmax.f32 %v1042, 0.0
        %v1228 = vmax.f32 %v789, 0.0
        %v1229 = vmax.f32 %v791, 0.0
        %v1230 = vmax.f32 %v1046, 0.0
        %v1231 = vmax.f32 %v1048, 0.0
        %v1232 = vmax.f32 %v795, 0.0
        %v1233 = vmax.f32 %v797, 0.0
        %v1234 = vmax.f32 %v1052, 0.0
        %v1235 = vmax.f32 %v1054, 0.0
        %v1236 = vmax.f32 %v801, 0.0
        %v1237 = vmax.f32 %v803, 0.0
        %v1238 = vmax.f32 %v1058, 0.0
        %v1239 = vmax.f32 %v1060, 0.0
        %v1240 = vmax.f32 %v807, 0.0
        %v1241 = vmax.f32 %v809, 0.0
        %v1242 = vmax.f32 %v1064, 0.0
        %v1243 = vmax.f32 %v1066, 0.0
        %v1244 = vmax.f32 %v813, 0.0
        %v1245 = vmax.f32 %v815, 0.0
        %v1246 = vmax.f32 %v1070, 0.0
        %v1247 = vmax.f32 %v1072, 0.0
        %v1248 = vmax.f32 %v819, 0.0
        %v1249 = vmax.f32 %v821, 0.0
        %v1250 = vmax.f32 %v1076, 0.0
        %v1251 = vmax.f32 %v1078, 0.0
        %v1252 = vmax.f32 %v825, 0.0
        %v1253 = vmax.f32 %v827, 0.0
        %v1254 = vmax.f32 %v1082, 0.0
        %v1255 = vmax.f32 %v1084, 0.0
        %v1256 = vmax.f32 %v831, 0.0
        %v1257 = vmax.f32 %v833, 0.0
        %v1258 = vmax.f32 %v1088, 0.0
        %v1259 = vmax.f32 %v1090, 0.0
        %v1260 = vmax.f32 %v837, 0.0
        %v1261 = vmax.f32 %v839, 0.0
        %v1262 = vmax.f32 %v1094, 0.0
        %v1263 = vmax.f32 %v1096, 0.0
        %v1264 = vmax.f32 %v843, 0.0
        %v1265 = vmax.f32 %v845, 0.0
        %v1266 = vmax.f32 %v1100, 0.0
        %v1267 = vmax.f32 %v1102, 0.0
        %v1268 = vmax.f32 %v849, 0.0
        %v1269 = vmax.f32 %v851, 0.0
        %v1270 = vmax.f32 %v1106, 0.0
        %v1271 = vmax.f32 %v1108, 0.0
        %v1272 = vmax.f32 %v855, 0.0
        %v1273 = vmax.f32 %v857, 0.0
        %v1274 = vmax.f32 %v1112, 0.0
        %v1275 = vmax.f32 %v1114, 0.0
        %v1276 = vmax.f32 %v861, 0.0
        %v1277 = vmax.f32 %v863, 0.0
        %v1278 = vmax.f32 %v1118, 0.0
        %v1279 = vmax.f32 %v1120, 0.0
        %v1280 = vmax.f32 %v867, 0.0
        %v1281 = vmax.f32 %v869, 0.0
        %v1282 = vmax.f32 %v1124, 0.0
        %v1283 = vmax.f32 %v1126, 0.0
        %v1284 = vmax.f32 %v873, 0.0
        %v1285 = vmax.f32 %v875, 0.0
        %v1286 = vmax.f32 %v1130, 0.0
        %v1287 = vmax.f32 %v1132, 0.0
        %v1288 = vmax.f32 %v879, 0.0
        %v1289 = vmax.f32 %v881, 0.0
        %v1290 = vmax.f32 %v1136, 0.0
        %v1291 = vmax.f32 %v1138, 0.0
        %v1292 = vmax.f32 %v885, 0.0
        %v1293 = vmax.f32 %v887, 0.0
        %v1294 = vmax.f32 %v1142, 0.0
        %v1295 = vmax.f32 %v1144, 0.0
        %v1296 = vmax.f32 %v891, 0.0
        %v1297 = vmax.f32 %v893, 0.0
        %v1298 = vmax.f32 %v1148, 0.0
        %v1299 = vmax.f32 %v1150, 0.0
        %v1300 = vmax.f32 %v897, 0.0
        %v1301 = vmax.f32 %v899, 0.0
        %v1302 = vmax.f32 %v1154, 0.0
        %v1303 = vmax.f32 %v1156, 0.0
        %v1304 = vmax.f32 %v903, 0.0
        %v1305 = vmax.f32 %v905, 0.0
        %v1306 = vmax.f32 %v1160, 0.0
        %v1307 = vmax.f32 %v1162, 0.0
        %v1308 = vmax.f32 %v909, 0.0
        %v1309 = vmax.f32 %v911, 0.0
        %v1310 = vmax.f32 %v1166, 0.0
        %v1311 = vmax.f32 %v1168, 0.0
        %v1312 = vmax.f32 %v915, 0.0
        %v1313 = vmax.f32 %v917, 0.0
        %v1314 = vmax.f32 %v1172, 0.0
        %v1315 = vmax.f32 %v1174, 0.0
        %v1316 = vmax.f32 %v921, 0.0
        %v1317 = vmax.f32 %v923, 0.0
        %v1318 = vmax.f32 %v1178, 0.0
        %v1319 = vmax.f32 %v1180, 0.0
        %v1320 = vmax.f32 %v927, 0.0
        %v1321 = vmax.f32 %v929, 0.0
        %v1322 = vmax.f32 %v1184, 0.0
        %v1323 = vmax.f32 %v1186, 0.0
        %v1324 = vmax.f32 %v933, 0.0
        %v1325 = vmax.f32 %v935, 0.0
        %v1326 = vmax.f32 %v1190, 0.0
        %v1327 = vmax.f32 %v1192, 0.0
        %v1328 = vmax.f32 %v939, 0.0
        %v1329 = vmax.f32 %v941, 0.0
        %v1330 = vmax.f32 %v1196, 0.0
        %v1331 = vmax.f32 %v1198, 0.0
        %v1332 = vmax.f32 %v945, 0.0
        %v1333 = vmax.f32 %v947, 0.0
        %v1334 = vmax.f32 %v1202, 0.0
        %v1335 = vmax.f32 %v1204, 0.0
        %v1336 = vmax.f32 %v951, 0.0
        %v1337 = vmax.f32 %v953, 0.0
        %v1338 = vmax.f32 %v1208, 0.0
        %v1339 = vmax.f32 %v1210, 0.0
        %v1340 = vpack.c.bf16 %v1216, %v1212
        %v1341 = vpack.c.bf16 %v1217, %v1213
        %v1342 = vpack.c.bf16 %v1218, %v1214
        %v1343 = vpack.c.bf16 %v1219, %v1215
        %v1344 = vpack.c.bf16 %v1224, %v1220
        %v1345 = vpack.c.bf16 %v1225, %v1221
        %v1346 = vpack.c.bf16 %v1226, %v1222
        %v1347 = vpack.c.bf16 %v1227, %v1223
        %v1348 = vpack.c.bf16 %v1232, %v1228
        %v1349 = vpack.c.bf16 %v1233, %v1229
        %v1350 = vpack.c.bf16 %v1234, %v1230
        %v1351 = vpack.c.bf16 %v1235, %v1231
        %v1352 = vpack.c.bf16 %v1240, %v1236
        %v1353 = vpack.c.bf16 %v1241, %v1237
        %v1354 = vpack.c.bf16 %v1242, %v1238
        %v1355 = vpack.c.bf16 %v1243, %v1239
        %v1356 = vpack.c.bf16 %v1248, %v1244
        %v1357 = vpack.c.bf16 %v1249, %v1245
        %v1358 = vpack.c.bf16 %v1250, %v1246
        %v1359 = vpack.c.bf16 %v1251, %v1247
        %v1360 = vpack.c.bf16 %v1256, %v1252
        %v1361 = vpack.c.bf16 %v1257, %v1253
        %v1362 = vpack.c.bf16 %v1258, %v1254
        %v1363 = vpack.c.bf16 %v1259, %v1255
        %v1364 = vpack.c.bf16 %v1264, %v1260
        %v1365 = vpack.c.bf16 %v1265, %v1261
        %v1366 = vpack.c.bf16 %v1266, %v1262
        %v1367 = vpack.c.bf16 %v1267, %v1263
        %v1368 = vpack.c.bf16 %v1272, %v1268
        %v1369 = vpack.c.bf16 %v1273, %v1269
        %v1370 = vpack.c.bf16 %v1274, %v1270
        %v1371 = vpack.c.bf16 %v1275, %v1271
        %v1372 = vpack.c.bf16 %v1280, %v1276
        %v1373 = vpack.c.bf16 %v1281, %v1277
        %v1374 = vpack.c.bf16 %v1282, %v1278
        %v1375 = vpack.c.bf16 %v1283, %v1279
        %v1376 = vpack.c.bf16 %v1288, %v1284
        %v1377 = vpack.c.bf16 %v1289, %v1285
        %v1378 = vpack.c.bf16 %v1290, %v1286
        %v1379 = vpack.c.bf16 %v1291, %v1287
        %v1380 = vpack.c.bf16 %v1296, %v1292
        %v1381 = vpack.c.bf16 %v1297, %v1293
        %v1382 = vpack.c.bf16 %v1298, %v1294
        %v1383 = vpack.c.bf16 %v1299, %v1295
        %v1384 = vpack.c.bf16 %v1304, %v1300
        %v1385 = vpack.c.bf16 %v1305, %v1301
        %v1386 = vpack.c.bf16 %v1306, %v1302
        %v1387 = vpack.c.bf16 %v1307, %v1303
        %v1388 = vpack.c.bf16 %v1312, %v1308
        %v1389 = vpack.c.bf16 %v1313, %v1309
        %v1390 = vpack.c.bf16 %v1314, %v1310
        %v1391 = vpack.c.bf16 %v1315, %v1311
        %v1392 = vpack.c.bf16 %v1320, %v1316
        %v1393 = vpack.c.bf16 %v1321, %v1317
        %v1394 = vpack.c.bf16 %v1322, %v1318
        %v1395 = vpack.c.bf16 %v1323, %v1319
        %v1396 = vpack.c.bf16 %v1328, %v1324
        %v1397 = vpack.c.bf16 %v1329, %v1325
        %v1398 = vpack.c.bf16 %v1330, %v1326
        %v1399 = vpack.c.bf16 %v1331, %v1327
        %v1400 = vpack.c.bf16 %v1336, %v1332
        %v1401 = vpack.c.bf16 %v1337, %v1333
        %v1402 = vpack.c.bf16 %v1338, %v1334
        %v1403 = vpack.c.bf16 %v1339, %v1335
        %v1404 = vld [vmem:[%s3] sm:$0xff]
        %v1405 = vld [vmem:[%s3 + $0x8] sm:$0xff]
        %v1406 = vld [vmem:[%s3 + $0x10] sm:$0xff]
        %v1407 = vld [vmem:[%s3 + $0x18] sm:$0xff]
        %v1408 = vld [vmem:[%s3 + $0x20] sm:$0xff]
        %v1409 = vld [vmem:[%s3 + $0x28] sm:$0xff]
        %v1410 = vld [vmem:[%s3 + $0x30] sm:$0xff]
        %v1411 = vld [vmem:[%s3 + $0x38] sm:$0xff]
        %v1412 = vld [vmem:[%s3 + $0x40] sm:$0xff]
        %v1413 = vld [vmem:[%s3 + $0x48] sm:$0xff]
        %v1414 = vld [vmem:[%s3 + $0x50] sm:$0xff]
        %v1415 = vld [vmem:[%s3 + $0x58] sm:$0xff]
        %v1416 = vld [vmem:[%s3 + $0x60] sm:$0xff]
        %v1417 = vld [vmem:[%s3 + $0x68] sm:$0xff]
        %v1418 = vld [vmem:[%s3 + $0x70] sm:$0xff]
        %v1419 = vld [vmem:[%s3 + $0x78] sm:$0xff]
        %v1420 = vld [vmem:[%s3 + $0x80] sm:$0xff]
        %v1421 = vld [vmem:[%s3 + $0x88] sm:$0xff]
        %v1422 = vld [vmem:[%s3 + $0x90] sm:$0xff]
        %v1423 = vld [vmem:[%s3 + $0x98] sm:$0xff]
        %v1424 = vld [vmem:[%s3 + $0xa0] sm:$0xff]
        %v1425 = vld [vmem:[%s3 + $0xa8] sm:$0xff]
        %v1426 = vld [vmem:[%s3 + $0xb0] sm:$0xff]
        %v1427 = vld [vmem:[%s3 + $0xb8] sm:$0xff]
        %v1428 = vld [vmem:[%s3 + $0xc0] sm:$0xff]
        %v1429 = vld [vmem:[%s3 + $0xc8] sm:$0xff]
        %v1430 = vld [vmem:[%s3 + $0xd0] sm:$0xff]
        %v1431 = vld [vmem:[%s3 + $0xd8] sm:$0xff]
        %v1432 = vld [vmem:[%s3 + $0xe0] sm:$0xff]
        %v1433 = vld [vmem:[%s3 + $0xe8] sm:$0xff]
        %v1434 = vld [vmem:[%s3 + $0xf0] sm:$0xff]
        %v1435 = vld [vmem:[%s3 + $0xf8] sm:$0xff]
        %v1436 = vld [vmem:[%s4] sm:$0xff]
        %v1437 = vld [vmem:[%s4 + $0x8] sm:$0xff]
        %v1438 = vld [vmem:[%s4 + $0x10] sm:$0xff]
        %v1439 = vld [vmem:[%s4 + $0x18] sm:$0xff]
        %v1440 = vld [vmem:[%s4 + $0x20] sm:$0xff]
        %v1441 = vld [vmem:[%s4 + $0x28] sm:$0xff]
        %v1442 = vld [vmem:[%s4 + $0x30] sm:$0xff]
        %v1443 = vld [vmem:[%s4 + $0x38] sm:$0xff]
        %v1444 = vld [vmem:[%s4 + $0x40] sm:$0xff]
        %v1445 = vld [vmem:[%s4 + $0x48] sm:$0xff]
        %v1446 = vld [vmem:[%s4 + $0x50] sm:$0xff]
        %v1447 = vld [vmem:[%s4 + $0x58] sm:$0xff]
        %v1448 = vld [vmem:[%s4 + $0x60] sm:$0xff]
        %v1449 = vld [vmem:[%s4 + $0x68] sm:$0xff]
        %v1450 = vld [vmem:[%s4 + $0x70] sm:$0xff]
        %v1451 = vld [vmem:[%s4 + $0x78] sm:$0xff]
        %v1452 = vld [vmem:[%s4 + $0x80] sm:$0xff]
        %v1453 = vld [vmem:[%s4 + $0x88] sm:$0xff]
        %v1454 = vld [vmem:[%s4 + $0x90] sm:$0xff]
        %v1455 = vld [vmem:[%s4 + $0x98] sm:$0xff]
        %v1456 = vld [vmem:[%s4 + $0xa0] sm:$0xff]
        %v1457 = vld [vmem:[%s4 + $0xa8] sm:$0xff]
        %v1458 = vld [vmem:[%s4 + $0xb0] sm:$0xff]
        %v1459 = vld [vmem:[%s4 + $0xb8] sm:$0xff]
        %v1460 = vld [vmem:[%s4 + $0xc0] sm:$0xff]
        %v1461 = vld [vmem:[%s4 + $0xc8] sm:$0xff]
        %v1462 = vld [vmem:[%s4 + $0xd0] sm:$0xff]
        %v1463 = vld [vmem:[%s4 + $0xd8] sm:$0xff]
        %v1464 = vld [vmem:[%s4 + $0xe0] sm:$0xff]
        %v1465 = vld [vmem:[%s4 + $0xe8] sm:$0xff]
        %v1466 = vld [vmem:[%s4 + $0xf0] sm:$0xff]
        %v1467 = vld [vmem:[%s4 + $0xf8] sm:$0xff]
        %1469 = vset.pattern.permute.xlu0 0
        %1470 = vperm.xlu0 %1469, %v1436
        %v1471 = vpop.permute.xlu0 %1470
        %1474 = vset.pattern.permute.xlu0 0
        %1475 = vperm.xlu0 %1474, %v1437
        %v1476 = vpop.permute.xlu0 %1475
        %1479 = vset.pattern.permute.xlu0 0
        %1480 = vperm.xlu0 %1479, %v1438
        %v1481 = vpop.permute.xlu0 %1480
        %1484 = vset.pattern.permute.xlu0 0
        %1485 = vperm.xlu0 %1484, %v1439
        %v1486 = vpop.permute.xlu0 %1485
        %1489 = vset.pattern.permute.xlu0 0
        %1490 = vperm.xlu0 %1489, %v1440
        %v1491 = vpop.permute.xlu0 %1490
        %1494 = vset.pattern.permute.xlu0 0
        %1495 = vperm.xlu0 %1494, %v1441
        %v1496 = vpop.permute.xlu0 %1495
        %1499 = vset.pattern.permute.xlu0 0
        %1500 = vperm.xlu0 %1499, %v1442
        %v1501 = vpop.permute.xlu0 %1500
        %1504 = vset.pattern.permute.xlu0 0
        %1505 = vperm.xlu0 %1504, %v1443
        %v1506 = vpop.permute.xlu0 %1505
        %1509 = vset.pattern.permute.xlu0 0
        %1510 = vperm.xlu0 %1509, %v1444
        %v1511 = vpop.permute.xlu0 %1510
        %1514 = vset.pattern.permute.xlu0 0
        %1515 = vperm.xlu0 %1514, %v1445
        %v1516 = vpop.permute.xlu0 %1515
        %1519 = vset.pattern.permute.xlu0 0
        %1520 = vperm.xlu0 %1519, %v1446
        %v1521 = vpop.permute.xlu0 %1520
        %1524 = vset.pattern.permute.xlu0 0
        %1525 = vperm.xlu0 %1524, %v1447
        %v1526 = vpop.permute.xlu0 %1525
        %1529 = vset.pattern.permute.xlu0 0
        %1530 = vperm.xlu0 %1529, %v1448
        %v1531 = vpop.permute.xlu0 %1530
        %1534 = vset.pattern.permute.xlu0 0
        %1535 = vperm.xlu0 %1534, %v1449
        %v1536 = vpop.permute.xlu0 %1535
        %1539 = vset.pattern.permute.xlu0 0
        %1540 = vperm.xlu0 %1539, %v1450
        %v1541 = vpop.permute.xlu0 %1540
        %1544 = vset.pattern.permute.xlu0 0
        %1545 = vperm.xlu0 %1544, %v1451
        %v1546 = vpop.permute.xlu0 %1545
        %1549 = vset.pattern.permute.xlu0 0
        %1550 = vperm.xlu0 %1549, %v1452
        %v1551 = vpop.permute.xlu0 %1550
        %1554 = vset.pattern.permute.xlu0 0
        %1555 = vperm.xlu0 %1554, %v1453
        %v1556 = vpop.permute.xlu0 %1555
        %1559 = vset.pattern.permute.xlu0 0
        %1560 = vperm.xlu0 %1559, %v1454
        %v1561 = vpop.permute.xlu0 %1560
        %1564 = vset.pattern.permute.xlu0 0
        %1565 = vperm.xlu0 %1564, %v1455
        %v1566 = vpop.permute.xlu0 %1565
        %1569 = vset.pattern.permute.xlu0 0
        %1570 = vperm.xlu0 %1569, %v1456
        %v1571 = vpop.permute.xlu0 %1570
        %1574 = vset.pattern.permute.xlu0 0
        %1575 = vperm.xlu0 %1574, %v1457
        %v1576 = vpop.permute.xlu0 %1575
        %1579 = vset.pattern.permute.xlu0 0
        %1580 = vperm.xlu0 %1579, %v1458
        %v1581 = vpop.permute.xlu0 %1580
        %1584 = vset.pattern.permute.xlu0 0
        %1585 = vperm.xlu0 %1584, %v1459
        %v1586 = vpop.permute.xlu0 %1585
        %1589 = vset.pattern.permute.xlu0 0
        %1590 = vperm.xlu0 %1589, %v1460
        %v1591 = vpop.permute.xlu0 %1590
        %1594 = vset.pattern.permute.xlu0 0
        %1595 = vperm.xlu0 %1594, %v1461
        %v1596 = vpop.permute.xlu0 %1595
        %1599 = vset.pattern.permute.xlu0 0
        %1600 = vperm.xlu0 %1599, %v1462
        %v1601 = vpop.permute.xlu0 %1600
        %1604 = vset.pattern.permute.xlu0 0
        %1605 = vperm.xlu0 %1604, %v1463
        %v1606 = vpop.permute.xlu0 %1605
        %1609 = vset.pattern.permute.xlu0 0
        %1610 = vperm.xlu0 %1609, %v1464
        %v1611 = vpop.permute.xlu0 %1610
        %1614 = vset.pattern.permute.xlu0 0
        %1615 = vperm.xlu0 %1614, %v1465
        %v1616 = vpop.permute.xlu0 %1615
        %1619 = vset.pattern.permute.xlu0 0
        %1620 = vperm.xlu0 %1619, %v1466
        %v1621 = vpop.permute.xlu0 %1620
        %1624 = vset.pattern.permute.xlu0 0
        %1625 = vperm.xlu0 %1624, %v1467
        %v1626 = vpop.permute.xlu0 %1625
        %v1660 = vunpack.c.l.b16 %v1404
        %v1661 = vunpack.c.h.b16 %v1404
        %v1662 = vunpack.c.l.b16 %v1405
        %v1663 = vunpack.c.h.b16 %v1405
        %v1664 = vunpack.c.l.b16 %v1406
        %v1665 = vunpack.c.h.b16 %v1406
        %v1666 = vunpack.c.l.b16 %v1407
        %v1667 = vunpack.c.h.b16 %v1407
        %v1668 = vunpack.c.l.b16 %v1408
        %v1669 = vunpack.c.h.b16 %v1408
        %v1670 = vunpack.c.l.b16 %v1409
        %v1671 = vunpack.c.h.b16 %v1409
        %v1672 = vunpack.c.l.b16 %v1410
        %v1673 = vunpack.c.h.b16 %v1410
        %v1674 = vunpack.c.l.b16 %v1411
        %v1675 = vunpack.c.h.b16 %v1411
        %v1676 = vunpack.c.l.b16 %v1412
        %v1677 = vunpack.c.h.b16 %v1412
        %v1678 = vunpack.c.l.b16 %v1413
        %v1679 = vunpack.c.h.b16 %v1413
        %v1680 = vunpack.c.l.b16 %v1414
        %v1681 = vunpack.c.h.b16 %v1414
        %v1682 = vunpack.c.l.b16 %v1415
        %v1683 = vunpack.c.h.b16 %v1415
        %v1684 = vunpack.c.l.b16 %v1416
        %v1685 = vunpack.c.h.b16 %v1416
        %v1686 = vunpack.c.l.b16 %v1417
        %v1687 = vunpack.c.h.b16 %v1417
        %v1688 = vunpack.c.l.b16 %v1418
        %v1689 = vunpack.c.h.b16 %v1418
        %v1690 = vunpack.c.l.b16 %v1419
        %v1691 = vunpack.c.h.b16 %v1419
        %v1692 = vunpack.c.l.b16 %v1420
        %v1693 = vunpack.c.h.b16 %v1420
        %v1694 = vunpack.c.l.b16 %v1421
        %v1695 = vunpack.c.h.b16 %v1421
        %v1696 = vunpack.c.l.b16 %v1422
        %v1697 = vunpack.c.h.b16 %v1422
        %v1698 = vunpack.c.l.b16 %v1423
        %v1699 = vunpack.c.h.b16 %v1423
        %v1700 = vunpack.c.l.b16 %v1424
        %v1701 = vunpack.c.h.b16 %v1424
        %v1702 = vunpack.c.l.b16 %v1425
        %v1703 = vunpack.c.h.b16 %v1425
        %v1704 = vunpack.c.l.b16 %v1426
        %v1705 = vunpack.c.h.b16 %v1426
        %v1706 = vunpack.c.l.b16 %v1427
        %v1707 = vunpack.c.h.b16 %v1427
        %v1708 = vunpack.c.l.b16 %v1428
        %v1709 = vunpack.c.h.b16 %v1428
        %v1710 = vunpack.c.l.b16 %v1429
        %v1711 = vunpack.c.h.b16 %v1429
        %v1712 = vunpack.c.l.b16 %v1430
        %v1713 = vunpack.c.h.b16 %v1430
        %v1714 = vunpack.c.l.b16 %v1431
        %v1715 = vunpack.c.h.b16 %v1431
        %v1716 = vunpack.c.l.b16 %v1432
        %v1717 = vunpack.c.h.b16 %v1432
        %v1718 = vunpack.c.l.b16 %v1433
        %v1719 = vunpack.c.h.b16 %v1433
        %v1720 = vunpack.c.l.b16 %v1434
        %v1721 = vunpack.c.h.b16 %v1434
        %v1722 = vunpack.c.l.b16 %v1435
        %v1723 = vunpack.c.h.b16 %v1435
        %v1724 = vpack.c.b16 %v1662, %v1660
        %v1725 = vpack.c.b16 %v1663, %v1661
        %v1726 = vpack.c.b16 %v1666, %v1664
        %v1727 = vpack.c.b16 %v1667, %v1665
        %v1728 = vpack.c.b16 %v1670, %v1668
        %v1729 = vpack.c.b16 %v1671, %v1669
        %v1730 = vpack.c.b16 %v1674, %v1672
        %v1731 = vpack.c.b16 %v1675, %v1673
        %v1732 = vpack.c.b16 %v1678, %v1676
        %v1733 = vpack.c.b16 %v1679, %v1677
        %v1734 = vpack.c.b16 %v1682, %v1680
        %v1735 = vpack.c.b16 %v1683, %v1681
        %v1736 = vpack.c.b16 %v1686, %v1684
        %v1737 = vpack.c.b16 %v1687, %v1685
        %v1738 = vpack.c.b16 %v1690, %v1688
        %v1739 = vpack.c.b16 %v1691, %v1689
        %v1740 = vpack.c.b16 %v1694, %v1692
        %v1741 = vpack.c.b16 %v1695, %v1693
        %v1742 = vpack.c.b16 %v1698, %v1696
        %v1743 = vpack.c.b16 %v1699, %v1697
        %v1744 = vpack.c.b16 %v1702, %v1700
        %v1745 = vpack.c.b16 %v1703, %v1701
        %v1746 = vpack.c.b16 %v1706, %v1704
        %v1747 = vpack.c.b16 %v1707, %v1705
        %v1748 = vpack.c.b16 %v1710, %v1708
        %v1749 = vpack.c.b16 %v1711, %v1709
        %v1750 = vpack.c.b16 %v1714, %v1712
        %v1751 = vpack.c.b16 %v1715, %v1713
        %v1752 = vpack.c.b16 %v1718, %v1716
        %v1753 = vpack.c.b16 %v1719, %v1717
        %v1754 = vpack.c.b16 %v1722, %v1720
        %v1755 = vpack.c.b16 %v1723, %v1721
        %1788 = vmatprep.subr.bf16.mxu0 %v1341
        %1789 = vmatpush1.bf16.msra.mxu0 %v1340
        %1790 = vmatprep.subr.bf16.mxu0 %v1345
        %1791 = vmatpush1.bf16.msra.mxu0 %v1344
        %1792 = vmatprep.subr.bf16.mxu0 %v1349
        %1793 = vmatpush1.bf16.msra.mxu0 %v1348
        %1794 = vmatprep.subr.bf16.mxu0 %v1353
        %1795 = vmatpush1.bf16.msra.mxu0 %v1352
        %1796 = vmatprep.subr.bf16.mxu0 %v1357
        %1797 = vmatpush1.bf16.msra.mxu0 %v1356
        %1798 = vmatprep.subr.bf16.mxu0 %v1361
        %1799 = vmatpush1.bf16.msra.mxu0 %v1360
        %1800 = vmatprep.subr.bf16.mxu0 %v1365
        %1801 = vmatpush1.bf16.msra.mxu0 %v1364
        %1802 = vmatprep.subr.bf16.mxu0 %v1369
        %1803 = vmatpush1.bf16.msra.mxu0 %v1368
        %1804 = vmatprep.subr.bf16.mxu0 %v1373
        %1805 = vmatpush1.bf16.msra.mxu0 %v1372
        %1806 = vmatprep.subr.bf16.mxu0 %v1377
        %1807 = vmatpush1.bf16.msra.mxu0 %v1376
        %1808 = vmatprep.subr.bf16.mxu0 %v1381
        %1809 = vmatpush1.bf16.msra.mxu0 %v1380
        %1810 = vmatprep.subr.bf16.mxu0 %v1385
        %1811 = vmatpush1.bf16.msra.mxu0 %v1384
        %1812 = vmatprep.subr.bf16.mxu0 %v1389
        %1813 = vmatpush1.bf16.msra.mxu0 %v1388
        %1814 = vmatprep.subr.bf16.mxu0 %v1393
        %1815 = vmatpush1.bf16.msra.mxu0 %v1392
        %1816 = vmatprep.subr.bf16.mxu0 %v1397
        %1817 = vmatpush1.bf16.msra.mxu0 %v1396
        %1818 = vmatprep.subr.bf16.mxu0 %v1401
        %1819 = vmatpush1.bf16.msra.mxu0 %v1400
        %1820 = vmatprep.mubr.bf16.mxu0 %v1725
        %1821 = vmatmul.mubr.bf16.gmra.mrb[0].mxu0 %v1724
        %v1822 = vpop.f32.mrb[0].mxu0
        %v1823 = vadd.f32 %v1471, %v1822
        %v1824 = vpop.f32.mrb[0].mxu0
        %v1825 = vadd.f32 %v1471, %v1824
        %v1826 = vpop.f32.mrb[0].mxu0
        %v1827 = vadd.f32 %v1476, %v1826
        %v1828 = vpop.f32.mrb[0].mxu0
        %v1829 = vadd.f32 %v1476, %v1828
        %1830 = vmatprep.mubr.bf16.mxu0 %v1727
        %1831 = vmatmul.mubr.bf16.gmra.mrb[0].mxu0 %v1726
        %v1832 = vpop.f32.mrb[0].mxu0
        %v1833 = vadd.f32 %v1481, %v1832
        %v1834 = vpop.f32.mrb[0].mxu0
        %v1835 = vadd.f32 %v1481, %v1834
        %v1836 = vpop.f32.mrb[0].mxu0
        %v1837 = vadd.f32 %v1486, %v1836
        %v1838 = vpop.f32.mrb[0].mxu0
        %v1839 = vadd.f32 %v1486, %v1838
        %1840 = vmatprep.mubr.bf16.mxu0 %v1729
        %1841 = vmatmul.mubr.bf16.gmra.mrb[0].mxu0 %v1728
        %v1842 = vpop.f32.mrb[0].mxu0
        %v1843 = vadd.f32 %v1491, %v1842
        %v1844 = vpop.f32.mrb[0].mxu0
        %v1845 = vadd.f32 %v1491, %v1844
        %v1846 = vpop.f32.mrb[0].mxu0
        %v1847 = vadd.f32 %v1496, %v1846
        %v1848 = vpop.f32.mrb[0].mxu0
        %v1849 = vadd.f32 %v1496, %v1848
        %1850 = vmatprep.mubr.bf16.mxu0 %v1731
        %1851 = vmatmul.mubr.bf16.gmra.mrb[0].mxu0 %v1730
        %v1852 = vpop.f32.mrb[0].mxu0
        %v1853 = vadd.f32 %v1501, %v1852
        %v1854 = vpop.f32.mrb[0].mxu0
        %v1855 = vadd.f32 %v1501, %v1854
        %v1856 = vpop.f32.mrb[0].mxu0
        %v1857 = vadd.f32 %v1506, %v1856
        %v1858 = vpop.f32.mrb[0].mxu0
        %v1859 = vadd.f32 %v1506, %v1858
        %1860 = vmatprep.mubr.bf16.mxu0 %v1733
        %1861 = vmatmul.mubr.bf16.gmra.mrb[0].mxu0 %v1732
        %v1862 = vpop.f32.mrb[0].mxu0
        %v1863 = vadd.f32 %v1511, %v1862
        %v1864 = vpop.f32.mrb[0].mxu0
        %v1865 = vadd.f32 %v1511, %v1864
        %v1866 = vpop.f32.mrb[0].mxu0
        %v1867 = vadd.f32 %v1516, %v1866
        %v1868 = vpop.f32.mrb[0].mxu0
        %v1869 = vadd.f32 %v1516, %v1868
        %1870 = vmatprep.mubr.bf16.mxu0 %v1735
        %1871 = vmatmul.mubr.bf16.gmra.mrb[0].mxu0 %v1734
        %v1872 = vpop.f32.mrb[0].mxu0
        %v1873 = vadd.f32 %v1521, %v1872
        %v1874 = vpop.f32.mrb[0].mxu0
        %v1875 = vadd.f32 %v1521, %v1874
        %v1876 = vpop.f32.mrb[0].mxu0
        %v1877 = vadd.f32 %v1526, %v1876
        %v1878 = vpop.f32.mrb[0].mxu0
        %v1879 = vadd.f32 %v1526, %v1878
        %1880 = vmatprep.mubr.bf16.mxu0 %v1737
        %1881 = vmatmul.mubr.bf16.gmra.mrb[0].mxu0 %v1736
        %v1882 = vpop.f32.mrb[0].mxu0
        %v1883 = vadd.f32 %v1531, %v1882
        %v1884 = vpop.f32.mrb[0].mxu0
        %v1885 = vadd.f32 %v1531, %v1884
        %v1886 = vpop.f32.mrb[0].mxu0
        %v1887 = vadd.f32 %v1536, %v1886
        %v1888 = vpop.f32.mrb[0].mxu0
        %v1889 = vadd.f32 %v1536, %v1888
        %1890 = vmatprep.mubr.bf16.mxu0 %v1739
        %1891 = vmatmul.mubr.bf16.gmra.mrb[0].mxu0 %v1738
        %v1892 = vpop.f32.mrb[0].mxu0
        %v1893 = vadd.f32 %v1541, %v1892
        %v1894 = vpop.f32.mrb[0].mxu0
        %v1895 = vadd.f32 %v1541, %v1894
        %v1896 = vpop.f32.mrb[0].mxu0
        %v1897 = vadd.f32 %v1546, %v1896
        %v1898 = vpop.f32.mrb[0].mxu0
        %v1899 = vadd.f32 %v1546, %v1898
        %1900 = vmatprep.mubr.bf16.mxu0 %v1741
        %1901 = vmatmul.mubr.bf16.gmra.mrb[0].mxu0 %v1740
        %v1902 = vpop.f32.mrb[0].mxu0
        %v1903 = vadd.f32 %v1551, %v1902
        %v1904 = vpop.f32.mrb[0].mxu0
        %v1905 = vadd.f32 %v1551, %v1904
        %v1906 = vpop.f32.mrb[0].mxu0
        %v1907 = vadd.f32 %v1556, %v1906
        %v1908 = vpop.f32.mrb[0].mxu0
        %v1909 = vadd.f32 %v1556, %v1908
        %1910 = vmatprep.mubr.bf16.mxu0 %v1743
        %1911 = vmatmul.mubr.bf16.gmra.mrb[0].mxu0 %v1742
        %v1912 = vpop.f32.mrb[0].mxu0
        %v1913 = vadd.f32 %v1561, %v1912
        %v1914 = vpop.f32.mrb[0].mxu0
        %v1915 = vadd.f32 %v1561, %v1914
        %v1916 = vpop.f32.mrb[0].mxu0
        %v1917 = vadd.f32 %v1566, %v1916
        %v1918 = vpop.f32.mrb[0].mxu0
        %v1919 = vadd.f32 %v1566, %v1918
        %1920 = vmatprep.mubr.bf16.mxu0 %v1745
        %1921 = vmatmul.mubr.bf16.gmra.mrb[0].mxu0 %v1744
        %v1922 = vpop.f32.mrb[0].mxu0
        %v1923 = vadd.f32 %v1571, %v1922
        %v1924 = vpop.f32.mrb[0].mxu0
        %v1925 = vadd.f32 %v1571, %v1924
        %v1926 = vpop.f32.mrb[0].mxu0
        %v1927 = vadd.f32 %v1576, %v1926
        %v1928 = vpop.f32.mrb[0].mxu0
        %v1929 = vadd.f32 %v1576, %v1928
        %1930 = vmatprep.mubr.bf16.mxu0 %v1747
        %1931 = vmatmul.mubr.bf16.gmra.mrb[0].mxu0 %v1746
        %v1932 = vpop.f32.mrb[0].mxu0
        %v1933 = vadd.f32 %v1581, %v1932
        %v1934 = vpop.f32.mrb[0].mxu0
        %v1935 = vadd.f32 %v1581, %v1934
        %v1936 = vpop.f32.mrb[0].mxu0
        %v1937 = vadd.f32 %v1586, %v1936
        %v1938 = vpop.f32.mrb[0].mxu0
        %v1939 = vadd.f32 %v1586, %v1938
        %1940 = vmatprep.mubr.bf16.mxu0 %v1749
        %1941 = vmatmul.mubr.bf16.gmra.mrb[0].mxu0 %v1748
        %v1942 = vpop.f32.mrb[0].mxu0
        %v1943 = vadd.f32 %v1591, %v1942
        %v1944 = vpop.f32.mrb[0].mxu0
        %v1945 = vadd.f32 %v1591, %v1944
        %v1946 = vpop.f32.mrb[0].mxu0
        %v1947 = vadd.f32 %v1596, %v1946
        %v1948 = vpop.f32.mrb[0].mxu0
        %v1949 = vadd.f32 %v1596, %v1948
        %1950 = vmatprep.mubr.bf16.mxu0 %v1751
        %1951 = vmatmul.mubr.bf16.gmra.mrb[0].mxu0 %v1750
        %v1952 = vpop.f32.mrb[0].mxu0
        %v1953 = vadd.f32 %v1601, %v1952
        %v1954 = vpop.f32.mrb[0].mxu0
        %v1955 = vadd.f32 %v1601, %v1954
        %v1956 = vpop.f32.mrb[0].mxu0
        %v1957 = vadd.f32 %v1606, %v1956
        %v1958 = vpop.f32.mrb[0].mxu0
        %v1959 = vadd.f32 %v1606, %v1958
        %1960 = vmatprep.mubr.bf16.mxu0 %v1753
        %1961 = vmatmul.mubr.bf16.gmra.mrb[0].mxu0 %v1752
        %v1962 = vpop.f32.mrb[0].mxu0
        %v1963 = vadd.f32 %v1611, %v1962
        %v1964 = vpop.f32.mrb[0].mxu0
        %v1965 = vadd.f32 %v1611, %v1964
        %v1966 = vpop.f32.mrb[0].mxu0
        %v1967 = vadd.f32 %v1616, %v1966
        %v1968 = vpop.f32.mrb[0].mxu0
        %v1969 = vadd.f32 %v1616, %v1968
        %1970 = vmatprep.mubr.bf16.mxu0 %v1755
        %1971 = vmatmul.mubr.bf16.gmra.mrb[0].mxu0 %v1754
        %v1972 = vpop.f32.mrb[0].mxu0
        %v1973 = vadd.f32 %v1621, %v1972
        %v1974 = vpop.f32.mrb[0].mxu0
        %v1975 = vadd.f32 %v1621, %v1974
        %v1976 = vpop.f32.mrb[0].mxu0
        %v1977 = vadd.f32 %v1626, %v1976
        %v1978 = vpop.f32.mrb[0].mxu0
        %v1979 = vadd.f32 %v1626, %v1978
        %1980 = vdwg.mxu0
        %1981 = vmatprep.subr.bf16.mxu0 %v1343
        %1982 = vmatpush1.bf16.msra.mxu0 %v1342
        %1983 = vmatprep.subr.bf16.mxu0 %v1347
        %1984 = vmatpush1.bf16.msra.mxu0 %v1346
        %1985 = vmatprep.subr.bf16.mxu0 %v1351
        %1986 = vmatpush1.bf16.msra.mxu0 %v1350
        %1987 = vmatprep.subr.bf16.mxu0 %v1355
        %1988 = vmatpush1.bf16.msra.mxu0 %v1354
        %1989 = vmatprep.subr.bf16.mxu0 %v1359
        %1990 = vmatpush1.bf16.msra.mxu0 %v1358
        %1991 = vmatprep.subr.bf16.mxu0 %v1363
        %1992 = vmatpush1.bf16.msra.mxu0 %v1362
        %1993 = vmatprep.subr.bf16.mxu0 %v1367
        %1994 = vmatpush1.bf16.msra.mxu0 %v1366
        %1995 = vmatprep.subr.bf16.mxu0 %v1371
        %1996 = vmatpush1.bf16.msra.mxu0 %v1370
        %1997 = vmatprep.subr.bf16.mxu0 %v1375
        %1998 = vmatpush1.bf16.msra.mxu0 %v1374
        %1999 = vmatprep.subr.bf16.mxu0 %v1379
        %2000 = vmatpush1.bf16.msra.mxu0 %v1378
        %2001 = vmatprep.subr.bf16.mxu0 %v1383
        %2002 = vmatpush1.bf16.msra.mxu0 %v1382
        %2003 = vmatprep.subr.bf16.mxu0 %v1387
        %2004 = vmatpush1.bf16.msra.mxu0 %v1386
        %2005 = vmatprep.subr.bf16.mxu0 %v1391
        %2006 = vmatpush1.bf16.msra.mxu0 %v1390
        %2007 = vmatprep.subr.bf16.mxu0 %v1395
        %2008 = vmatpush1.bf16.msra.mxu0 %v1394
        %2009 = vmatprep.subr.bf16.mxu0 %v1399
        %2010 = vmatpush1.bf16.msra.mxu0 %v1398
        %2011 = vmatprep.subr.bf16.mxu0 %v1403
        %2012 = vmatpush1.bf16.msra.mxu0 %v1402
        %2013 = vmatprep.mubr.bf16.mxu0 %v1725
        %2014 = vmatmul.mubr.bf16.gmra.mrb[0].mxu0 %v1724
        %v2015 = vpop.f32.mrb[0].mxu0
        %v2016 = vadd.f32 %v1471, %v2015
        %v2017 = vpop.f32.mrb[0].mxu0
        %v2018 = vadd.f32 %v1471, %v2017
        %v2019 = vpop.f32.mrb[0].mxu0
        %v2020 = vadd.f32 %v1476, %v2019
        %v2021 = vpop.f32.mrb[0].mxu0
        %v2022 = vadd.f32 %v1476, %v2021
        %2023 = vmatprep.mubr.bf16.mxu0 %v1727
        %2024 = vmatmul.mubr.bf16.gmra.mrb[0].mxu0 %v1726
        %v2025 = vpop.f32.mrb[0].mxu0
        %v2026 = vadd.f32 %v1481, %v2025
        %v2027 = vpop.f32.mrb[0].mxu0
        %v2028 = vadd.f32 %v1481, %v2027
        %v2029 = vpop.f32.mrb[0].mxu0
        %v2030 = vadd.f32 %v1486, %v2029
        %v2031 = vpop.f32.mrb[0].mxu0
        %v2032 = vadd.f32 %v1486, %v2031
        %2033 = vmatprep.mubr.bf16.mxu0 %v1729
        %2034 = vmatmul.mubr.bf16.gmra.mrb[0].mxu0 %v1728
        %v2035 = vpop.f32.mrb[0].mxu0
        %v2036 = vadd.f32 %v1491, %v2035
        %v2037 = vpop.f32.mrb[0].mxu0
        %v2038 = vadd.f32 %v1491, %v2037
        %v2039 = vpop.f32.mrb[0].mxu0
        %v2040 = vadd.f32 %v1496, %v2039
        %v2041 = vpop.f32.mrb[0].mxu0
        %v2042 = vadd.f32 %v1496, %v2041
        %2043 = vmatprep.mubr.bf16.mxu0 %v1731
        %2044 = vmatmul.mubr.bf16.gmra.mrb[0].mxu0 %v1730
        %v2045 = vpop.f32.mrb[0].mxu0
        %v2046 = vadd.f32 %v1501, %v2045
        %v2047 = vpop.f32.mrb[0].mxu0
        %v2048 = vadd.f32 %v1501, %v2047
        %v2049 = vpop.f32.mrb[0].mxu0
        %v2050 = vadd.f32 %v1506, %v2049
        %v2051 = vpop.f32.mrb[0].mxu0
        %v2052 = vadd.f32 %v1506, %v2051
        %2053 = vmatprep.mubr.bf16.mxu0 %v1733
        %2054 = vmatmul.mubr.bf16.gmra.mrb[0].mxu0 %v1732
        %v2055 = vpop.f32.mrb[0].mxu0
        %v2056 = vadd.f32 %v1511, %v2055
        %v2057 = vpop.f32.mrb[0].mxu0
        %v2058 = vadd.f32 %v1511, %v2057
        %v2059 = vpop.f32.mrb[0].mxu0
        %v2060 = vadd.f32 %v1516, %v2059
        %v2061 = vpop.f32.mrb[0].mxu0
        %v2062 = vadd.f32 %v1516, %v2061
        %2063 = vmatprep.mubr.bf16.mxu0 %v1735
        %2064 = vmatmul.mubr.bf16.gmra.mrb[0].mxu0 %v1734
        %v2065 = vpop.f32.mrb[0].mxu0
        %v2066 = vadd.f32 %v1521, %v2065
        %v2067 = vpop.f32.mrb[0].mxu0
        %v2068 = vadd.f32 %v1521, %v2067
        %v2069 = vpop.f32.mrb[0].mxu0
        %v2070 = vadd.f32 %v1526, %v2069
        %v2071 = vpop.f32.mrb[0].mxu0
        %v2072 = vadd.f32 %v1526, %v2071
        %2073 = vmatprep.mubr.bf16.mxu0 %v1737
        %2074 = vmatmul.mubr.bf16.gmra.mrb[0].mxu0 %v1736
        %v2075 = vpop.f32.mrb[0].mxu0
        %v2076 = vadd.f32 %v1531, %v2075
        %v2077 = vpop.f32.mrb[0].mxu0
        %v2078 = vadd.f32 %v1531, %v2077
        %v2079 = vpop.f32.mrb[0].mxu0
        %v2080 = vadd.f32 %v1536, %v2079
        %v2081 = vpop.f32.mrb[0].mxu0
        %v2082 = vadd.f32 %v1536, %v2081
        %2083 = vmatprep.mubr.bf16.mxu0 %v1739
        %2084 = vmatmul.mubr.bf16.gmra.mrb[0].mxu0 %v1738
        %v2085 = vpop.f32.mrb[0].mxu0
        %v2086 = vadd.f32 %v1541, %v2085
        %v2087 = vpop.f32.mrb[0].mxu0
        %v2088 = vadd.f32 %v1541, %v2087
        %v2089 = vpop.f32.mrb[0].mxu0
        %v2090 = vadd.f32 %v1546, %v2089
        %v2091 = vpop.f32.mrb[0].mxu0
        %v2092 = vadd.f32 %v1546, %v2091
        %2093 = vmatprep.mubr.bf16.mxu0 %v1741
        %2094 = vmatmul.mubr.bf16.gmra.mrb[0].mxu0 %v1740
        %v2095 = vpop.f32.mrb[0].mxu0
        %v2096 = vadd.f32 %v1551, %v2095
        %v2097 = vpop.f32.mrb[0].mxu0
        %v2098 = vadd.f32 %v1551, %v2097
        %v2099 = vpop.f32.mrb[0].mxu0
        %v2100 = vadd.f32 %v1556, %v2099
        %v2101 = vpop.f32.mrb[0].mxu0
        %v2102 = vadd.f32 %v1556, %v2101
        %2103 = vmatprep.mubr.bf16.mxu0 %v1743
        %2104 = vmatmul.mubr.bf16.gmra.mrb[0].mxu0 %v1742
        %v2105 = vpop.f32.mrb[0].mxu0
        %v2106 = vadd.f32 %v1561, %v2105
        %v2107 = vpop.f32.mrb[0].mxu0
        %v2108 = vadd.f32 %v1561, %v2107
        %v2109 = vpop.f32.mrb[0].mxu0
        %v2110 = vadd.f32 %v1566, %v2109
        %v2111 = vpop.f32.mrb[0].mxu0
        %v2112 = vadd.f32 %v1566, %v2111
        %2113 = vmatprep.mubr.bf16.mxu0 %v1745
        %2114 = vmatmul.mubr.bf16.gmra.mrb[0].mxu0 %v1744
        %v2115 = vpop.f32.mrb[0].mxu0
        %v2116 = vadd.f32 %v1571, %v2115
        %v2117 = vpop.f32.mrb[0].mxu0
        %v2118 = vadd.f32 %v1571, %v2117
        %v2119 = vpop.f32.mrb[0].mxu0
        %v2120 = vadd.f32 %v1576, %v2119
        %v2121 = vpop.f32.mrb[0].mxu0
        %v2122 = vadd.f32 %v1576, %v2121
        %2123 = vmatprep.mubr.bf16.mxu0 %v1747
        %2124 = vmatmul.mubr.bf16.gmra.mrb[0].mxu0 %v1746
        %v2125 = vpop.f32.mrb[0].mxu0
        %v2126 = vadd.f32 %v1581, %v2125
        %v2127 = vpop.f32.mrb[0].mxu0
        %v2128 = vadd.f32 %v1581, %v2127
        %v2129 = vpop.f32.mrb[0].mxu0
        %v2130 = vadd.f32 %v1586, %v2129
        %v2131 = vpop.f32.mrb[0].mxu0
        %v2132 = vadd.f32 %v1586, %v2131
        %2133 = vmatprep.mubr.bf16.mxu0 %v1749
        %2134 = vmatmul.mubr.bf16.gmra.mrb[0].mxu0 %v1748
        %v2135 = vpop.f32.mrb[0].mxu0
        %v2136 = vadd.f32 %v1591, %v2135
        %v2137 = vpop.f32.mrb[0].mxu0
        %v2138 = vadd.f32 %v1591, %v2137
        %v2139 = vpop.f32.mrb[0].mxu0
        %v2140 = vadd.f32 %v1596, %v2139
        %v2141 = vpop.f32.mrb[0].mxu0
        %v2142 = vadd.f32 %v1596, %v2141
        %2143 = vmatprep.mubr.bf16.mxu0 %v1751
        %2144 = vmatmul.mubr.bf16.gmra.mrb[0].mxu0 %v1750
        %v2145 = vpop.f32.mrb[0].mxu0
        %v2146 = vadd.f32 %v1601, %v2145
        %v2147 = vpop.f32.mrb[0].mxu0
        %v2148 = vadd.f32 %v1601, %v2147
        %v2149 = vpop.f32.mrb[0].mxu0
        %v2150 = vadd.f32 %v1606, %v2149
        %v2151 = vpop.f32.mrb[0].mxu0
        %v2152 = vadd.f32 %v1606, %v2151
        %2153 = vmatprep.mubr.bf16.mxu0 %v1753
        %2154 = vmatmul.mubr.bf16.gmra.mrb[0].mxu0 %v1752
        %v2155 = vpop.f32.mrb[0].mxu0
        %v2156 = vadd.f32 %v1611, %v2155
        %v2157 = vpop.f32.mrb[0].mxu0
        %v2158 = vadd.f32 %v1611, %v2157
        %v2159 = vpop.f32.mrb[0].mxu0
        %v2160 = vadd.f32 %v1616, %v2159
        %v2161 = vpop.f32.mrb[0].mxu0
        %v2162 = vadd.f32 %v1616, %v2161
        %2163 = vmatprep.mubr.bf16.mxu0 %v1755
        %2164 = vmatmul.mubr.bf16.gmra.mrb[0].mxu0 %v1754
        %v2165 = vpop.f32.mrb[0].mxu0
        %v2166 = vadd.f32 %v1621, %v2165
        %v2167 = vpop.f32.mrb[0].mxu0
        %v2168 = vadd.f32 %v1621, %v2167
        %v2169 = vpop.f32.mrb[0].mxu0
        %v2170 = vadd.f32 %v1626, %v2169
        %v2171 = vpop.f32.mrb[0].mxu0
        %v2172 = vadd.f32 %v1626, %v2171
        %2173 = vdwg.mxu0
        %v2174 = vmax.f32 %v1823, 0.0
        %v2175 = vmax.f32 %v1825, 0.0
        %v2176 = vmax.f32 %v2016, 0.0
        %v2177 = vmax.f32 %v2018, 0.0
        %v2178 = vmax.f32 %v1827, 0.0
        %v2179 = vmax.f32 %v1829, 0.0
        %v2180 = vmax.f32 %v2020, 0.0
        %v2181 = vmax.f32 %v2022, 0.0
        %v2182 = vmax.f32 %v1833, 0.0
        %v2183 = vmax.f32 %v1835, 0.0
        %v2184 = vmax.f32 %v2026, 0.0
        %v2185 = vmax.f32 %v2028, 0.0
        %v2186 = vmax.f32 %v1837, 0.0
        %v2187 = vmax.f32 %v1839, 0.0
        %v2188 = vmax.f32 %v2030, 0.0
        %v2189 = vmax.f32 %v2032, 0.0
        %v2190 = vmax.f32 %v1843, 0.0
        %v2191 = vmax.f32 %v1845, 0.0
        %v2192 = vmax.f32 %v2036, 0.0
        %v2193 = vmax.f32 %v2038, 0.0
        %v2194 = vmax.f32 %v1847, 0.0
        %v2195 = vmax.f32 %v1849, 0.0
        %v2196 = vmax.f32 %v2040, 0.0
        %v2197 = vmax.f32 %v2042, 0.0
        %v2198 = vmax.f32 %v1853, 0.0
        %v2199 = vmax.f32 %v1855, 0.0
        %v2200 = vmax.f32 %v2046, 0.0
        %v2201 = vmax.f32 %v2048, 0.0
        %v2202 = vmax.f32 %v1857, 0.0
        %v2203 = vmax.f32 %v1859, 0.0
        %v2204 = vmax.f32 %v2050, 0.0
        %v2205 = vmax.f32 %v2052, 0.0
        %v2206 = vmax.f32 %v1863, 0.0
        %v2207 = vmax.f32 %v1865, 0.0
        %v2208 = vmax.f32 %v2056, 0.0
        %v2209 = vmax.f32 %v2058, 0.0
        %v2210 = vmax.f32 %v1867, 0.0
        %v2211 = vmax.f32 %v1869, 0.0
        %v2212 = vmax.f32 %v2060, 0.0
        %v2213 = vmax.f32 %v2062, 0.0
        %v2214 = vmax.f32 %v1873, 0.0
        %v2215 = vmax.f32 %v1875, 0.0
        %v2216 = vmax.f32 %v2066, 0.0
        %v2217 = vmax.f32 %v2068, 0.0
        %v2218 = vmax.f32 %v1877, 0.0
        %v2219 = vmax.f32 %v1879, 0.0
        %v2220 = vmax.f32 %v2070, 0.0
        %v2221 = vmax.f32 %v2072, 0.0
        %v2222 = vmax.f32 %v1883, 0.0
        %v2223 = vmax.f32 %v1885, 0.0
        %v2224 = vmax.f32 %v2076, 0.0
        %v2225 = vmax.f32 %v2078, 0.0
        %v2226 = vmax.f32 %v1887, 0.0
        %v2227 = vmax.f32 %v1889, 0.0
        %v2228 = vmax.f32 %v2080, 0.0
        %v2229 = vmax.f32 %v2082, 0.0
        %v2230 = vmax.f32 %v1893, 0.0
        %v2231 = vmax.f32 %v1895, 0.0
        %v2232 = vmax.f32 %v2086, 0.0
        %v2233 = vmax.f32 %v2088, 0.0
        %v2234 = vmax.f32 %v1897, 0.0
        %v2235 = vmax.f32 %v1899, 0.0
        %v2236 = vmax.f32 %v2090, 0.0
        %v2237 = vmax.f32 %v2092, 0.0
        %v2238 = vmax.f32 %v1903, 0.0
        %v2239 = vmax.f32 %v1905, 0.0
        %v2240 = vmax.f32 %v2096, 0.0
        %v2241 = vmax.f32 %v2098, 0.0
        %v2242 = vmax.f32 %v1907, 0.0
        %v2243 = vmax.f32 %v1909, 0.0
        %v2244 = vmax.f32 %v2100, 0.0
        %v2245 = vmax.f32 %v2102, 0.0
        %v2246 = vmax.f32 %v1913, 0.0
        %v2247 = vmax.f32 %v1915, 0.0
        %v2248 = vmax.f32 %v2106, 0.0
        %v2249 = vmax.f32 %v2108, 0.0
        %v2250 = vmax.f32 %v1917, 0.0
        %v2251 = vmax.f32 %v1919, 0.0
        %v2252 = vmax.f32 %v2110, 0.0
        %v2253 = vmax.f32 %v2112, 0.0
        %v2254 = vmax.f32 %v1923, 0.0
        %v2255 = vmax.f32 %v1925, 0.0
        %v2256 = vmax.f32 %v2116, 0.0
        %v2257 = vmax.f32 %v2118, 0.0
        %v2258 = vmax.f32 %v1927, 0.0
        %v2259 = vmax.f32 %v1929, 0.0
        %v2260 = vmax.f32 %v2120, 0.0
        %v2261 = vmax.f32 %v2122, 0.0
        %v2262 = vmax.f32 %v1933, 0.0
        %v2263 = vmax.f32 %v1935, 0.0
        %v2264 = vmax.f32 %v2126, 0.0
        %v2265 = vmax.f32 %v2128, 0.0
        %v2266 = vmax.f32 %v1937, 0.0
        %v2267 = vmax.f32 %v1939, 0.0
        %v2268 = vmax.f32 %v2130, 0.0
        %v2269 = vmax.f32 %v2132, 0.0
        %v2270 = vmax.f32 %v1943, 0.0
        %v2271 = vmax.f32 %v1945, 0.0
        %v2272 = vmax.f32 %v2136, 0.0
        %v2273 = vmax.f32 %v2138, 0.0
        %v2274 = vmax.f32 %v1947, 0.0
        %v2275 = vmax.f32 %v1949, 0.0
        %v2276 = vmax.f32 %v2140, 0.0
        %v2277 = vmax.f32 %v2142, 0.0
        %v2278 = vmax.f32 %v1953, 0.0
        %v2279 = vmax.f32 %v1955, 0.0
        %v2280 = vmax.f32 %v2146, 0.0
        %v2281 = vmax.f32 %v2148, 0.0
        %v2282 = vmax.f32 %v1957, 0.0
        %v2283 = vmax.f32 %v1959, 0.0
        %v2284 = vmax.f32 %v2150, 0.0
        %v2285 = vmax.f32 %v2152, 0.0
        %v2286 = vmax.f32 %v1963, 0.0
        %v2287 = vmax.f32 %v1965, 0.0
        %v2288 = vmax.f32 %v2156, 0.0
        %v2289 = vmax.f32 %v2158, 0.0
        %v2290 = vmax.f32 %v1967, 0.0
        %v2291 = vmax.f32 %v1969, 0.0
        %v2292 = vmax.f32 %v2160, 0.0
        %v2293 = vmax.f32 %v2162, 0.0
        %v2294 = vmax.f32 %v1973, 0.0
        %v2295 = vmax.f32 %v1975, 0.0
        %v2296 = vmax.f32 %v2166, 0.0
        %v2297 = vmax.f32 %v2168, 0.0
        %v2298 = vmax.f32 %v1977, 0.0
        %v2299 = vmax.f32 %v1979, 0.0
        %v2300 = vmax.f32 %v2170, 0.0
        %v2301 = vmax.f32 %v2172, 0.0
        %v2302 = vpack.c.bf16 %v2178, %v2174
        %v2303 = vpack.c.bf16 %v2179, %v2175
        %v2304 = vpack.c.bf16 %v2180, %v2176
        %v2305 = vpack.c.bf16 %v2181, %v2177
        %v2306 = vpack.c.bf16 %v2186, %v2182
        %v2307 = vpack.c.bf16 %v2187, %v2183
        %v2308 = vpack.c.bf16 %v2188, %v2184
        %v2309 = vpack.c.bf16 %v2189, %v2185
        %v2310 = vpack.c.bf16 %v2194, %v2190
        %v2311 = vpack.c.bf16 %v2195, %v2191
        %v2312 = vpack.c.bf16 %v2196, %v2192
        %v2313 = vpack.c.bf16 %v2197, %v2193
        %v2314 = vpack.c.bf16 %v2202, %v2198
        %v2315 = vpack.c.bf16 %v2203, %v2199
        %v2316 = vpack.c.bf16 %v2204, %v2200
        %v2317 = vpack.c.bf16 %v2205, %v2201
        %v2318 = vpack.c.bf16 %v2210, %v2206
        %v2319 = vpack.c.bf16 %v2211, %v2207
        %v2320 = vpack.c.bf16 %v2212, %v2208
        %v2321 = vpack.c.bf16 %v2213, %v2209
        %v2322 = vpack.c.bf16 %v2218, %v2214
        %v2323 = vpack.c.bf16 %v2219, %v2215
        %v2324 = vpack.c.bf16 %v2220, %v2216
        %v2325 = vpack.c.bf16 %v2221, %v2217
        %v2326 = vpack.c.bf16 %v2226, %v2222
        %v2327 = vpack.c.bf16 %v2227, %v2223
        %v2328 = vpack.c.bf16 %v2228, %v2224
        %v2329 = vpack.c.bf16 %v2229, %v2225
        %v2330 = vpack.c.bf16 %v2234, %v2230
        %v2331 = vpack.c.bf16 %v2235, %v2231
        %v2332 = vpack.c.bf16 %v2236, %v2232
        %v2333 = vpack.c.bf16 %v2237, %v2233
        %v2334 = vpack.c.bf16 %v2242, %v2238
        %v2335 = vpack.c.bf16 %v2243, %v2239
        %v2336 = vpack.c.bf16 %v2244, %v2240
        %v2337 = vpack.c.bf16 %v2245, %v2241
        %v2338 = vpack.c.bf16 %v2250, %v2246
        %v2339 = vpack.c.bf16 %v2251, %v2247
        %v2340 = vpack.c.bf16 %v2252, %v2248
        %v2341 = vpack.c.bf16 %v2253, %v2249
        %v2342 = vpack.c.bf16 %v2258, %v2254
        %v2343 = vpack.c.bf16 %v2259, %v2255
        %v2344 = vpack.c.bf16 %v2260, %v2256
        %v2345 = vpack.c.bf16 %v2261, %v2257
        %v2346 = vpack.c.bf16 %v2266, %v2262
        %v2347 = vpack.c.bf16 %v2267, %v2263
        %v2348 = vpack.c.bf16 %v2268, %v2264
        %v2349 = vpack.c.bf16 %v2269, %v2265
        %v2350 = vpack.c.bf16 %v2274, %v2270
        %v2351 = vpack.c.bf16 %v2275, %v2271
        %v2352 = vpack.c.bf16 %v2276, %v2272
        %v2353 = vpack.c.bf16 %v2277, %v2273
        %v2354 = vpack.c.bf16 %v2282, %v2278
        %v2355 = vpack.c.bf16 %v2283, %v2279
        %v2356 = vpack.c.bf16 %v2284, %v2280
        %v2357 = vpack.c.bf16 %v2285, %v2281
        %v2358 = vpack.c.bf16 %v2290, %v2286
        %v2359 = vpack.c.bf16 %v2291, %v2287
        %v2360 = vpack.c.bf16 %v2292, %v2288
        %v2361 = vpack.c.bf16 %v2293, %v2289
        %v2362 = vpack.c.bf16 %v2298, %v2294
        %v2363 = vpack.c.bf16 %v2299, %v2295
        %v2364 = vpack.c.bf16 %v2300, %v2296
        %v2365 = vpack.c.bf16 %v2301, %v2297
        %v2366 = vld [vmem:[%s5] sm:$0xff]
        %v2367 = vld [vmem:[%s5 + $0x8] sm:$0xff]
        %v2368 = vld [vmem:[%s5 + $0x10] sm:$0xff]
        %v2369 = vld [vmem:[%s5 + $0x18] sm:$0xff]
        %v2370 = vld [vmem:[%s5 + $0x20] sm:$0xff]
        %v2371 = vld [vmem:[%s5 + $0x28] sm:$0xff]
        %v2372 = vld [vmem:[%s5 + $0x30] sm:$0xff]
        %v2373 = vld [vmem:[%s5 + $0x38] sm:$0xff]
        %v2374 = vld [vmem:[%s5 + $0x40] sm:$0xff]
        %v2375 = vld [vmem:[%s5 + $0x48] sm:$0xff]
        %v2376 = vld [vmem:[%s5 + $0x50] sm:$0xff]
        %v2377 = vld [vmem:[%s5 + $0x58] sm:$0xff]
        %v2378 = vld [vmem:[%s5 + $0x60] sm:$0xff]
        %v2379 = vld [vmem:[%s5 + $0x68] sm:$0xff]
        %v2380 = vld [vmem:[%s5 + $0x70] sm:$0xff]
        %v2381 = vld [vmem:[%s5 + $0x78] sm:$0xff]
        %v2382 = vld [vmem:[%s6] sm:$0xff]
        %v2383 = vld [vmem:[%s6 + $0x8] sm:$0xff]
        %v2384 = vld [vmem:[%s6 + $0x10] sm:$0xff]
        %v2385 = vld [vmem:[%s6 + $0x18] sm:$0xff]
        %v2386 = vld [vmem:[%s6 + $0x20] sm:$0xff]
        %v2387 = vld [vmem:[%s6 + $0x28] sm:$0xff]
        %v2388 = vld [vmem:[%s6 + $0x30] sm:$0xff]
        %v2389 = vld [vmem:[%s6 + $0x38] sm:$0xff]
        %v2390 = vld [vmem:[%s6 + $0x40] sm:$0xff]
        %v2391 = vld [vmem:[%s6 + $0x48] sm:$0xff]
        %v2392 = vld [vmem:[%s6 + $0x50] sm:$0xff]
        %v2393 = vld [vmem:[%s6 + $0x58] sm:$0xff]
        %v2394 = vld [vmem:[%s6 + $0x60] sm:$0xff]
        %v2395 = vld [vmem:[%s6 + $0x68] sm:$0xff]
        %v2396 = vld [vmem:[%s6 + $0x70] sm:$0xff]
        %v2397 = vld [vmem:[%s6 + $0x78] sm:$0xff]
        %2399 = vset.pattern.permute.xlu0 0
        %2400 = vperm.xlu0 %2399, %v2382
        %v2401 = vpop.permute.xlu0 %2400
        %2404 = vset.pattern.permute.xlu0 0
        %2405 = vperm.xlu0 %2404, %v2383
        %v2406 = vpop.permute.xlu0 %2405
        %2409 = vset.pattern.permute.xlu0 0
        %2410 = vperm.xlu0 %2409, %v2384
        %v2411 = vpop.permute.xlu0 %2410
        %2414 = vset.pattern.permute.xlu0 0
        %2415 = vperm.xlu0 %2414, %v2385
        %v2416 = vpop.permute.xlu0 %2415
        %2419 = vset.pattern.permute.xlu0 0
        %2420 = vperm.xlu0 %2419, %v2386
        %v2421 = vpop.permute.xlu0 %2420
        %2424 = vset.pattern.permute.xlu0 0
        %2425 = vperm.xlu0 %2424, %v2387
        %v2426 = vpop.permute.xlu0 %2425
        %2429 = vset.pattern.permute.xlu0 0
        %2430 = vperm.xlu0 %2429, %v2388
        %v2431 = vpop.permute.xlu0 %2430
        %2434 = vset.pattern.permute.xlu0 0
        %2435 = vperm.xlu0 %2434, %v2389
        %v2436 = vpop.permute.xlu0 %2435
        %2439 = vset.pattern.permute.xlu0 0
        %2440 = vperm.xlu0 %2439, %v2390
        %v2441 = vpop.permute.xlu0 %2440
        %2444 = vset.pattern.permute.xlu0 0
        %2445 = vperm.xlu0 %2444, %v2391
        %v2446 = vpop.permute.xlu0 %2445
        %2449 = vset.pattern.permute.xlu0 0
        %2450 = vperm.xlu0 %2449, %v2392
        %v2451 = vpop.permute.xlu0 %2450
        %2454 = vset.pattern.permute.xlu0 0
        %2455 = vperm.xlu0 %2454, %v2393
        %v2456 = vpop.permute.xlu0 %2455
        %2459 = vset.pattern.permute.xlu0 0
        %2460 = vperm.xlu0 %2459, %v2394
        %v2461 = vpop.permute.xlu0 %2460
        %2464 = vset.pattern.permute.xlu0 0
        %2465 = vperm.xlu0 %2464, %v2395
        %v2466 = vpop.permute.xlu0 %2465
        %2469 = vset.pattern.permute.xlu0 0
        %2470 = vperm.xlu0 %2469, %v2396
        %v2471 = vpop.permute.xlu0 %2470
        %2474 = vset.pattern.permute.xlu0 0
        %2475 = vperm.xlu0 %2474, %v2397
        %v2476 = vpop.permute.xlu0 %2475
        %v2494 = vunpack.c.l.b16 %v2366
        %v2495 = vunpack.c.h.b16 %v2366
        %v2496 = vunpack.c.l.b16 %v2367
        %v2497 = vunpack.c.h.b16 %v2367
        %v2498 = vunpack.c.l.b16 %v2368
        %v2499 = vunpack.c.h.b16 %v2368
        %v2500 = vunpack.c.l.b16 %v2369
        %v2501 = vunpack.c.h.b16 %v2369
        %v2502 = vunpack.c.l.b16 %v2370
        %v2503 = vunpack.c.h.b16 %v2370
        %v2504 = vunpack.c.l.b16 %v2371
        %v2505 = vunpack.c.h.b16 %v2371
        %v2506 = vunpack.c.l.b16 %v2372
        %v2507 = vunpack.c.h.b16 %v2372
        %v2508 = vunpack.c.l.b16 %v2373
        %v2509 = vunpack.c.h.b16 %v2373
        %v2510 = vunpack.c.l.b16 %v2374
        %v2511 = vunpack.c.h.b16 %v2374
        %v2512 = vunpack.c.l.b16 %v2375
        %v2513 = vunpack.c.h.b16 %v2375
        %v2514 = vunpack.c.l.b16 %v2376
        %v2515 = vunpack.c.h.b16 %v2376
        %v2516 = vunpack.c.l.b16 %v2377
        %v2517 = vunpack.c.h.b16 %v2377
        %v2518 = vunpack.c.l.b16 %v2378
        %v2519 = vunpack.c.h.b16 %v2378
        %v2520 = vunpack.c.l.b16 %v2379
        %v2521 = vunpack.c.h.b16 %v2379
        %v2522 = vunpack.c.l.b16 %v2380
        %v2523 = vunpack.c.h.b16 %v2380
        %v2524 = vunpack.c.l.b16 %v2381
        %v2525 = vunpack.c.h.b16 %v2381
        %v2526 = vpack.c.b16 %v2496, %v2494
        %v2527 = vpack.c.b16 %v2497, %v2495
        %v2528 = vpack.c.b16 %v2500, %v2498
        %v2529 = vpack.c.b16 %v2501, %v2499
        %v2530 = vpack.c.b16 %v2504, %v2502
        %v2531 = vpack.c.b16 %v2505, %v2503
        %v2532 = vpack.c.b16 %v2508, %v2506
        %v2533 = vpack.c.b16 %v2509, %v2507
        %v2534 = vpack.c.b16 %v2512, %v2510
        %v2535 = vpack.c.b16 %v2513, %v2511
        %v2536 = vpack.c.b16 %v2516, %v2514
        %v2537 = vpack.c.b16 %v2517, %v2515
        %v2538 = vpack.c.b16 %v2520, %v2518
        %v2539 = vpack.c.b16 %v2521, %v2519
        %v2540 = vpack.c.b16 %v2524, %v2522
        %v2541 = vpack.c.b16 %v2525, %v2523
        %2558 = vmatprep.subr.bf16.mxu0 %v2303
        %2559 = vmatpush1.bf16.msra.mxu0 %v2302
        %2560 = vmatprep.subr.bf16.mxu0 %v2307
        %2561 = vmatpush1.bf16.msra.mxu0 %v2306
        %2562 = vmatprep.subr.bf16.mxu0 %v2311
        %2563 = vmatpush1.bf16.msra.mxu0 %v2310
        %2564 = vmatprep.subr.bf16.mxu0 %v2315
        %2565 = vmatpush1.bf16.msra.mxu0 %v2314
        %2566 = vmatprep.subr.bf16.mxu0 %v2319
        %2567 = vmatpush1.bf16.msra.mxu0 %v2318
        %2568 = vmatprep.subr.bf16.mxu0 %v2323
        %2569 = vmatpush1.bf16.msra.mxu0 %v2322
        %2570 = vmatprep.subr.bf16.mxu0 %v2327
        %2571 = vmatpush1.bf16.msra.mxu0 %v2326
        %2572 = vmatprep.subr.bf16.mxu0 %v2331
        %2573 = vmatpush1.bf16.msra.mxu0 %v2330
        %2574 = vmatprep.subr.bf16.mxu0 %v2335
        %2575 = vmatpush1.bf16.msra.mxu0 %v2334
        %2576 = vmatprep.subr.bf16.mxu0 %v2339
        %2577 = vmatpush1.bf16.msra.mxu0 %v2338
        %2578 = vmatprep.subr.bf16.mxu0 %v2343
        %2579 = vmatpush1.bf16.msra.mxu0 %v2342
        %2580 = vmatprep.subr.bf16.mxu0 %v2347
        %2581 = vmatpush1.bf16.msra.mxu0 %v2346
        %2582 = vmatprep.subr.bf16.mxu0 %v2351
        %2583 = vmatpush1.bf16.msra.mxu0 %v2350
        %2584 = vmatprep.subr.bf16.mxu0 %v2355
        %2585 = vmatpush1.bf16.msra.mxu0 %v2354
        %2586 = vmatprep.subr.bf16.mxu0 %v2359
        %2587 = vmatpush1.bf16.msra.mxu0 %v2358
        %2588 = vmatprep.subr.bf16.mxu0 %v2363
        %2589 = vmatpush1.bf16.msra.mxu0 %v2362
        %2590 = vmatprep.mubr.bf16.mxu0 %v2527
        %2591 = vmatmul.mubr.bf16.gmra.mrb[0].mxu0 %v2526
        %v2592 = vpop.f32.mrb[0].mxu0
        %v2593 = vadd.f32 %v2401, %v2592
        %v2594 = vpop.f32.mrb[0].mxu0
        %v2595 = vadd.f32 %v2401, %v2594
        %v2596 = vpop.f32.mrb[0].mxu0
        %v2597 = vadd.f32 %v2406, %v2596
        %v2598 = vpop.f32.mrb[0].mxu0
        %v2599 = vadd.f32 %v2406, %v2598
        %2600 = vmatprep.mubr.bf16.mxu0 %v2529
        %2601 = vmatmul.mubr.bf16.gmra.mrb[0].mxu0 %v2528
        %v2602 = vpop.f32.mrb[0].mxu0
        %v2603 = vadd.f32 %v2411, %v2602
        %v2604 = vpop.f32.mrb[0].mxu0
        %v2605 = vadd.f32 %v2411, %v2604
        %v2606 = vpop.f32.mrb[0].mxu0
        %v2607 = vadd.f32 %v2416, %v2606
        %v2608 = vpop.f32.mrb[0].mxu0
        %v2609 = vadd.f32 %v2416, %v2608
        %2610 = vmatprep.mubr.bf16.mxu0 %v2531
        %2611 = vmatmul.mubr.bf16.gmra.mrb[0].mxu0 %v2530
        %v2612 = vpop.f32.mrb[0].mxu0
        %v2613 = vadd.f32 %v2421, %v2612
        %v2614 = vpop.f32.mrb[0].mxu0
        %v2615 = vadd.f32 %v2421, %v2614
        %v2616 = vpop.f32.mrb[0].mxu0
        %v2617 = vadd.f32 %v2426, %v2616
        %v2618 = vpop.f32.mrb[0].mxu0
        %v2619 = vadd.f32 %v2426, %v2618
        %2620 = vmatprep.mubr.bf16.mxu0 %v2533
        %2621 = vmatmul.mubr.bf16.gmra.mrb[0].mxu0 %v2532
        %v2622 = vpop.f32.mrb[0].mxu0
        %v2623 = vadd.f32 %v2431, %v2622
        %v2624 = vpop.f32.mrb[0].mxu0
        %v2625 = vadd.f32 %v2431, %v2624
        %v2626 = vpop.f32.mrb[0].mxu0
        %v2627 = vadd.f32 %v2436, %v2626
        %v2628 = vpop.f32.mrb[0].mxu0
        %v2629 = vadd.f32 %v2436, %v2628
        %2630 = vmatprep.mubr.bf16.mxu0 %v2535
        %2631 = vmatmul.mubr.bf16.gmra.mrb[0].mxu0 %v2534
        %v2632 = vpop.f32.mrb[0].mxu0
        %v2633 = vadd.f32 %v2441, %v2632
        %v2634 = vpop.f32.mrb[0].mxu0
        %v2635 = vadd.f32 %v2441, %v2634
        %v2636 = vpop.f32.mrb[0].mxu0
        %v2637 = vadd.f32 %v2446, %v2636
        %v2638 = vpop.f32.mrb[0].mxu0
        %v2639 = vadd.f32 %v2446, %v2638
        %2640 = vmatprep.mubr.bf16.mxu0 %v2537
        %2641 = vmatmul.mubr.bf16.gmra.mrb[0].mxu0 %v2536
        %v2642 = vpop.f32.mrb[0].mxu0
        %v2643 = vadd.f32 %v2451, %v2642
        %v2644 = vpop.f32.mrb[0].mxu0
        %v2645 = vadd.f32 %v2451, %v2644
        %v2646 = vpop.f32.mrb[0].mxu0
        %v2647 = vadd.f32 %v2456, %v2646
        %v2648 = vpop.f32.mrb[0].mxu0
        %v2649 = vadd.f32 %v2456, %v2648
        %2650 = vmatprep.mubr.bf16.mxu0 %v2539
        %2651 = vmatmul.mubr.bf16.gmra.mrb[0].mxu0 %v2538
        %v2652 = vpop.f32.mrb[0].mxu0
        %v2653 = vadd.f32 %v2461, %v2652
        %v2654 = vpop.f32.mrb[0].mxu0
        %v2655 = vadd.f32 %v2461, %v2654
        %v2656 = vpop.f32.mrb[0].mxu0
        %v2657 = vadd.f32 %v2466, %v2656
        %v2658 = vpop.f32.mrb[0].mxu0
        %v2659 = vadd.f32 %v2466, %v2658
        %2660 = vmatprep.mubr.bf16.mxu0 %v2541
        %2661 = vmatmul.mubr.bf16.gmra.mrb[0].mxu0 %v2540
        %v2662 = vpop.f32.mrb[0].mxu0
        %v2663 = vadd.f32 %v2471, %v2662
        %v2664 = vpop.f32.mrb[0].mxu0
        %v2665 = vadd.f32 %v2471, %v2664
        %v2666 = vpop.f32.mrb[0].mxu0
        %v2667 = vadd.f32 %v2476, %v2666
        %v2668 = vpop.f32.mrb[0].mxu0
        %v2669 = vadd.f32 %v2476, %v2668
        %2670 = vdwg.mxu0
        %2671 = vmatprep.subr.bf16.mxu0 %v2305
        %2672 = vmatpush1.bf16.msra.mxu0 %v2304
        %2673 = vmatprep.subr.bf16.mxu0 %v2309
        %2674 = vmatpush1.bf16.msra.mxu0 %v2308
        %2675 = vmatprep.subr.bf16.mxu0 %v2313
        %2676 = vmatpush1.bf16.msra.mxu0 %v2312
        %2677 = vmatprep.subr.bf16.mxu0 %v2317
        %2678 = vmatpush1.bf16.msra.mxu0 %v2316
        %2679 = vmatprep.subr.bf16.mxu0 %v2321
        %2680 = vmatpush1.bf16.msra.mxu0 %v2320
        %2681 = vmatprep.subr.bf16.mxu0 %v2325
        %2682 = vmatpush1.bf16.msra.mxu0 %v2324
        %2683 = vmatprep.subr.bf16.mxu0 %v2329
        %2684 = vmatpush1.bf16.msra.mxu0 %v2328
        %2685 = vmatprep.subr.bf16.mxu0 %v2333
        %2686 = vmatpush1.bf16.msra.mxu0 %v2332
        %2687 = vmatprep.subr.bf16.mxu0 %v2337
        %2688 = vmatpush1.bf16.msra.mxu0 %v2336
        %2689 = vmatprep.subr.bf16.mxu0 %v2341
        %2690 = vmatpush1.bf16.msra.mxu0 %v2340
        %2691 = vmatprep.subr.bf16.mxu0 %v2345
        %2692 = vmatpush1.bf16.msra.mxu0 %v2344
        %2693 = vmatprep.subr.bf16.mxu0 %v2349
        %2694 = vmatpush1.bf16.msra.mxu0 %v2348
        %2695 = vmatprep.subr.bf16.mxu0 %v2353
        %2696 = vmatpush1.bf16.msra.mxu0 %v2352
        %2697 = vmatprep.subr.bf16.mxu0 %v2357
        %2698 = vmatpush1.bf16.msra.mxu0 %v2356
        %2699 = vmatprep.subr.bf16.mxu0 %v2361
        %2700 = vmatpush1.bf16.msra.mxu0 %v2360
        %2701 = vmatprep.subr.bf16.mxu0 %v2365
        %2702 = vmatpush1.bf16.msra.mxu0 %v2364
        %2703 = vmatprep.mubr.bf16.mxu0 %v2527
        %2704 = vmatmul.mubr.bf16.gmra.mrb[0].mxu0 %v2526
        %v2705 = vpop.f32.mrb[0].mxu0
        %v2706 = vadd.f32 %v2401, %v2705
        %v2707 = vpop.f32.mrb[0].mxu0
        %v2708 = vadd.f32 %v2401, %v2707
        %v2709 = vpop.f32.mrb[0].mxu0
        %v2710 = vadd.f32 %v2406, %v2709
        %v2711 = vpop.f32.mrb[0].mxu0
        %v2712 = vadd.f32 %v2406, %v2711
        %2713 = vmatprep.mubr.bf16.mxu0 %v2529
        %2714 = vmatmul.mubr.bf16.gmra.mrb[0].mxu0 %v2528
        %v2715 = vpop.f32.mrb[0].mxu0
        %v2716 = vadd.f32 %v2411, %v2715
        %v2717 = vpop.f32.mrb[0].mxu0
        %v2718 = vadd.f32 %v2411, %v2717
        %v2719 = vpop.f32.mrb[0].mxu0
        %v2720 = vadd.f32 %v2416, %v2719
        %v2721 = vpop.f32.mrb[0].mxu0
        %v2722 = vadd.f32 %v2416, %v2721
        %2723 = vmatprep.mubr.bf16.mxu0 %v2531
        %2724 = vmatmul.mubr.bf16.gmra.mrb[0].mxu0 %v2530
        %v2725 = vpop.f32.mrb[0].mxu0
        %v2726 = vadd.f32 %v2421, %v2725
        %v2727 = vpop.f32.mrb[0].mxu0
        %v2728 = vadd.f32 %v2421, %v2727
        %v2729 = vpop.f32.mrb[0].mxu0
        %v2730 = vadd.f32 %v2426, %v2729
        %v2731 = vpop.f32.mrb[0].mxu0
        %v2732 = vadd.f32 %v2426, %v2731
        %2733 = vmatprep.mubr.bf16.mxu0 %v2533
        %2734 = vmatmul.mubr.bf16.gmra.mrb[0].mxu0 %v2532
        %v2735 = vpop.f32.mrb[0].mxu0
        %v2736 = vadd.f32 %v2431, %v2735
        %v2737 = vpop.f32.mrb[0].mxu0
        %v2738 = vadd.f32 %v2431, %v2737
        %v2739 = vpop.f32.mrb[0].mxu0
        %v2740 = vadd.f32 %v2436, %v2739
        %v2741 = vpop.f32.mrb[0].mxu0
        %v2742 = vadd.f32 %v2436, %v2741
        %2743 = vmatprep.mubr.bf16.mxu0 %v2535
        %2744 = vmatmul.mubr.bf16.gmra.mrb[0].mxu0 %v2534
        %v2745 = vpop.f32.mrb[0].mxu0
        %v2746 = vadd.f32 %v2441, %v2745
        %v2747 = vpop.f32.mrb[0].mxu0
        %v2748 = vadd.f32 %v2441, %v2747
        %v2749 = vpop.f32.mrb[0].mxu0
        %v2750 = vadd.f32 %v2446, %v2749
        %v2751 = vpop.f32.mrb[0].mxu0
        %v2752 = vadd.f32 %v2446, %v2751
        %2753 = vmatprep.mubr.bf16.mxu0 %v2537
        %2754 = vmatmul.mubr.bf16.gmra.mrb[0].mxu0 %v2536
        %v2755 = vpop.f32.mrb[0].mxu0
        %v2756 = vadd.f32 %v2451, %v2755
        %v2757 = vpop.f32.mrb[0].mxu0
        %v2758 = vadd.f32 %v2451, %v2757
        %v2759 = vpop.f32.mrb[0].mxu0
        %v2760 = vadd.f32 %v2456, %v2759
        %v2761 = vpop.f32.mrb[0].mxu0
        %v2762 = vadd.f32 %v2456, %v2761
        %2763 = vmatprep.mubr.bf16.mxu0 %v2539
        %2764 = vmatmul.mubr.bf16.gmra.mrb[0].mxu0 %v2538
        %v2765 = vpop.f32.mrb[0].mxu0
        %v2766 = vadd.f32 %v2461, %v2765
        %v2767 = vpop.f32.mrb[0].mxu0
        %v2768 = vadd.f32 %v2461, %v2767
        %v2769 = vpop.f32.mrb[0].mxu0
        %v2770 = vadd.f32 %v2466, %v2769
        %v2771 = vpop.f32.mrb[0].mxu0
        %v2772 = vadd.f32 %v2466, %v2771
        %2773 = vmatprep.mubr.bf16.mxu0 %v2541
        %2774 = vmatmul.mubr.bf16.gmra.mrb[0].mxu0 %v2540
        %v2775 = vpop.f32.mrb[0].mxu0
        %v2776 = vadd.f32 %v2471, %v2775
        %v2777 = vpop.f32.mrb[0].mxu0
        %v2778 = vadd.f32 %v2471, %v2777
        %v2779 = vpop.f32.mrb[0].mxu0
        %v2780 = vadd.f32 %v2476, %v2779
        %v2781 = vpop.f32.mrb[0].mxu0
        %v2782 = vadd.f32 %v2476, %v2781
        %2783 = vdwg.mxu0
        %v2784 = vmax.f32 %v2593, 0.0
        %v2785 = vmax.f32 %v2595, 0.0
        %v2786 = vmax.f32 %v2706, 0.0
        %v2787 = vmax.f32 %v2708, 0.0
        %v2788 = vmax.f32 %v2597, 0.0
        %v2789 = vmax.f32 %v2599, 0.0
        %v2790 = vmax.f32 %v2710, 0.0
        %v2791 = vmax.f32 %v2712, 0.0
        %v2792 = vmax.f32 %v2603, 0.0
        %v2793 = vmax.f32 %v2605, 0.0
        %v2794 = vmax.f32 %v2716, 0.0
        %v2795 = vmax.f32 %v2718, 0.0
        %v2796 = vmax.f32 %v2607, 0.0
        %v2797 = vmax.f32 %v2609, 0.0
        %v2798 = vmax.f32 %v2720, 0.0
        %v2799 = vmax.f32 %v2722, 0.0
        %v2800 = vmax.f32 %v2613, 0.0
        %v2801 = vmax.f32 %v2615, 0.0
        %v2802 = vmax.f32 %v2726, 0.0
        %v2803 = vmax.f32 %v2728, 0.0
        %v2804 = vmax.f32 %v2617, 0.0
        %v2805 = vmax.f32 %v2619, 0.0
        %v2806 = vmax.f32 %v2730, 0.0
        %v2807 = vmax.f32 %v2732, 0.0
        %v2808 = vmax.f32 %v2623, 0.0
        %v2809 = vmax.f32 %v2625, 0.0
        %v2810 = vmax.f32 %v2736, 0.0
        %v2811 = vmax.f32 %v2738, 0.0
        %v2812 = vmax.f32 %v2627, 0.0
        %v2813 = vmax.f32 %v2629, 0.0
        %v2814 = vmax.f32 %v2740, 0.0
        %v2815 = vmax.f32 %v2742, 0.0
        %v2816 = vmax.f32 %v2633, 0.0
        %v2817 = vmax.f32 %v2635, 0.0
        %v2818 = vmax.f32 %v2746, 0.0
        %v2819 = vmax.f32 %v2748, 0.0
        %v2820 = vmax.f32 %v2637, 0.0
        %v2821 = vmax.f32 %v2639, 0.0
        %v2822 = vmax.f32 %v2750, 0.0
        %v2823 = vmax.f32 %v2752, 0.0
        %v2824 = vmax.f32 %v2643, 0.0
        %v2825 = vmax.f32 %v2645, 0.0
        %v2826 = vmax.f32 %v2756, 0.0
        %v2827 = vmax.f32 %v2758, 0.0
        %v2828 = vmax.f32 %v2647, 0.0
        %v2829 = vmax.f32 %v2649, 0.0
        %v2830 = vmax.f32 %v2760, 0.0
        %v2831 = vmax.f32 %v2762, 0.0
        %v2832 = vmax.f32 %v2653, 0.0
        %v2833 = vmax.f32 %v2655, 0.0
        %v2834 = vmax.f32 %v2766, 0.0
        %v2835 = vmax.f32 %v2768, 0.0
        %v2836 = vmax.f32 %v2657, 0.0
        %v2837 = vmax.f32 %v2659, 0.0
        %v2838 = vmax.f32 %v2770, 0.0
        %v2839 = vmax.f32 %v2772, 0.0
        %v2840 = vmax.f32 %v2663, 0.0
        %v2841 = vmax.f32 %v2665, 0.0
        %v2842 = vmax.f32 %v2776, 0.0
        %v2843 = vmax.f32 %v2778, 0.0
        %v2844 = vmax.f32 %v2667, 0.0
        %v2845 = vmax.f32 %v2669, 0.0
        %v2846 = vmax.f32 %v2780, 0.0
        %v2847 = vmax.f32 %v2782, 0.0
        %v2848 = vpack.c.bf16 %v2788, %v2784
        %v2849 = vpack.c.bf16 %v2789, %v2785
        %v2850 = vpack.c.bf16 %v2790, %v2786
        %v2851 = vpack.c.bf16 %v2791, %v2787
        %v2852 = vpack.c.bf16 %v2796, %v2792
        %v2853 = vpack.c.bf16 %v2797, %v2793
        %v2854 = vpack.c.bf16 %v2798, %v2794
        %v2855 = vpack.c.bf16 %v2799, %v2795
        %v2856 = vpack.c.bf16 %v2804, %v2800
        %v2857 = vpack.c.bf16 %v2805, %v2801
        %v2858 = vpack.c.bf16 %v2806, %v2802
        %v2859 = vpack.c.bf16 %v2807, %v2803
        %v2860 = vpack.c.bf16 %v2812, %v2808
        %v2861 = vpack.c.bf16 %v2813, %v2809
        %v2862 = vpack.c.bf16 %v2814, %v2810
        %v2863 = vpack.c.bf16 %v2815, %v2811
        %v2864 = vpack.c.bf16 %v2820, %v2816
        %v2865 = vpack.c.bf16 %v2821, %v2817
        %v2866 = vpack.c.bf16 %v2822, %v2818
        %v2867 = vpack.c.bf16 %v2823, %v2819
        %v2868 = vpack.c.bf16 %v2828, %v2824
        %v2869 = vpack.c.bf16 %v2829, %v2825
        %v2870 = vpack.c.bf16 %v2830, %v2826
        %v2871 = vpack.c.bf16 %v2831, %v2827
        %v2872 = vpack.c.bf16 %v2836, %v2832
        %v2873 = vpack.c.bf16 %v2837, %v2833
        %v2874 = vpack.c.bf16 %v2838, %v2834
        %v2875 = vpack.c.bf16 %v2839, %v2835
        %v2876 = vpack.c.bf16 %v2844, %v2840
        %v2877 = vpack.c.bf16 %v2845, %v2841
        %v2878 = vpack.c.bf16 %v2846, %v2842
        %v2879 = vpack.c.bf16 %v2847, %v2843
        %v2880 = vld [vmem:[%s7] sm:$0xf]
        %2881 = vmatprep.subr.bf16.mxu0 %v2849
        %2882 = vmatpush1.bf16.msra.mxu0 %v2848
        %2883 = vmatprep.subr.bf16.mxu0 %v2853
        %2884 = vmatpush1.bf16.msra.mxu0 %v2852
        %2885 = vmatprep.subr.bf16.mxu0 %v2857
        %2886 = vmatpush1.bf16.msra.mxu0 %v2856
        %2887 = vmatprep.subr.bf16.mxu0 %v2861
        %2888 = vmatpush1.bf16.msra.mxu0 %v2860
        %2889 = vmatprep.subr.bf16.mxu0 %v2865
        %2890 = vmatpush1.bf16.msra.mxu0 %v2864
        %2891 = vmatprep.subr.bf16.mxu0 %v2869
        %2892 = vmatpush1.bf16.msra.mxu0 %v2868
        %2893 = vmatprep.subr.bf16.mxu0 %v2873
        %2894 = vmatpush1.bf16.msra.mxu0 %v2872
        %2895 = vmatprep.subr.bf16.mxu0 %v2877
        %2896 = vmatpush1.bf16.msra.mxu0 %v2876
        %2897 = vmatprep.subr.bf16.mxu0 0
        %2898 = vmatpush1.bf16.msra.mxu0 0
        %2899 = vmatprep.subr.bf16.mxu0 0
        %2900 = vmatpush1.bf16.msra.mxu0 0
        %2901 = vmatprep.subr.bf16.mxu0 0
        %2902 = vmatpush1.bf16.msra.mxu0 0
        %2903 = vmatprep.subr.bf16.mxu0 0
        %2904 = vmatpush1.bf16.msra.mxu0 0
        %2905 = vmatprep.subr.bf16.mxu0 0
        %2906 = vmatpush1.bf16.msra.mxu0 0
        %2907 = vmatprep.subr.bf16.mxu0 0
        %2908 = vmatpush1.bf16.msra.mxu0 0
        %2909 = vmatprep.subr.bf16.mxu0 0
        %2910 = vmatpush1.bf16.msra.mxu0 0
        %2911 = vmatprep.subr.bf16.mxu0 0
        %2912 = vmatpush1.bf16.msra.mxu0 0
        %2913 = vmatprep.mubr.bf16.mxu0 0
        %2914 = vmatmul.mubr.bf16.gmra.mrb[0].mxu0 %v2880
        %v2915 = vpop.f32.mrb[0].mxu0
        %v2916 = vadd.f32 0.0, %v2915
        %v2917 = vpop.f32.mrb[0].mxu0
        %v2918 = vadd.f32 0.0, %v2917
        %v2919 = vpop.f32.mrb[0].mxu0
        %v2920 = vpop.f32.mrb[0].mxu0
        %2921 = vdwg.mxu0
        %2922 = vmatprep.subr.bf16.mxu0 %v2851
        %2923 = vmatpush1.bf16.msra.mxu0 %v2850
        %2924 = vmatprep.subr.bf16.mxu0 %v2855
        %2925 = vmatpush1.bf16.msra.mxu0 %v2854
        %2926 = vmatprep.subr.bf16.mxu0 %v2859
        %2927 = vmatpush1.bf16.msra.mxu0 %v2858
        %2928 = vmatprep.subr.bf16.mxu0 %v2863
        %2929 = vmatpush1.bf16.msra.mxu0 %v2862
        %2930 = vmatprep.subr.bf16.mxu0 %v2867
        %2931 = vmatpush1.bf16.msra.mxu0 %v2866
        %2932 = vmatprep.subr.bf16.mxu0 %v2871
        %2933 = vmatpush1.bf16.msra.mxu0 %v2870
        %2934 = vmatprep.subr.bf16.mxu0 %v2875
        %2935 = vmatpush1.bf16.msra.mxu0 %v2874
        %2936 = vmatprep.subr.bf16.mxu0 %v2879
        %2937 = vmatpush1.bf16.msra.mxu0 %v2878
        %2938 = vmatprep.subr.bf16.mxu0 0
        %2939 = vmatpush1.bf16.msra.mxu0 0
        %2940 = vmatprep.subr.bf16.mxu0 0
        %2941 = vmatpush1.bf16.msra.mxu0 0
        %2942 = vmatprep.subr.bf16.mxu0 0
        %2943 = vmatpush1.bf16.msra.mxu0 0
        %2944 = vmatprep.subr.bf16.mxu0 0
        %2945 = vmatpush1.bf16.msra.mxu0 0
        %2946 = vmatprep.subr.bf16.mxu0 0
        %2947 = vmatpush1.bf16.msra.mxu0 0
        %2948 = vmatprep.subr.bf16.mxu0 0
        %2949 = vmatpush1.bf16.msra.mxu0 0
        %2950 = vmatprep.subr.bf16.mxu0 0
        %2951 = vmatpush1.bf16.msra.mxu0 0
        %2952 = vmatprep.subr.bf16.mxu0 0
        %2953 = vmatpush1.bf16.msra.mxu0 0
        %2954 = vmatprep.mubr.bf16.mxu0 0
        %2955 = vmatmul.mubr.bf16.gmra.mrb[0].mxu0 %v2880
        %v2956 = vpop.f32.mrb[0].mxu0
        %v2957 = vadd.f32 0.0, %v2956
        %v2958 = vpop.f32.mrb[0].mxu0
        %v2959 = vadd.f32 0.0, %v2958
        %v2960 = vpop.f32.mrb[0].mxu0
        %v2961 = vpop.f32.mrb[0].mxu0
        %2962 = vdwg.mxu0
        %2963 = vst [vmem:[%s366] sm:$0xff] %v2916
        %2964 = vst [vmem:[%s366 + $0x8] sm:$0xff] %v2918
        %2965 = vst [vmem:[%s366 + $0x10] sm:$0xff] %v2957
        %2966 = vst [vmem:[%s366 + $0x18] sm:$0xff] %v2959
        %s2967 = smul.u32 4, %s24
        %p2968 = scmp.lt.s32.totalorder %s23, 1
        %s2969 = scalar_select %p2968, %s23, 1
        %p2970 = scmp.lt.s32.totalorder %s2967, 7
        %s2971 = scalar_select %p2970, %s2967, 7
        %s2972 = smul.addr %s2969, 8
        %s2973 = sadd.s32 %s2971, %s2972
        %s2974 = smul.addr %s2973, 8
        %s2975 = scalar_lea.vmem %s8, %s2974
        // Predicated region
        $region76: #{normal_prediction_forward.1} parent=70 // pred_check
          %p2976 = pneg %p226
        $region77: #{normal_prediction_forward.1} parent=70 // pred_check_branch
          %2978 = sbr.rel (%p2976) target = $region79
        $region78: #{normal_prediction_forward.1} parent=70 // pred_region
          %s2979 = smul.u32 4, %s24
        $region79: #{normal_prediction_forward.1} parent=70 // pred_fallthru
          _
      $region71: #{normal_prediction_forward.1} parent=5 // pred_fallthru
        _
      %p2980 = scmp.le.s32.totalorder 2, %s14
      // Predicated region
      $region80: #{normal_prediction_forward.1} parent=5 // pred_check
        %p2981 = pneg %p2980
      $region81: #{normal_prediction_forward.1} parent=5 // pred_check_branch
        %2983 = sbr.rel (%p2981) target = $region83
      $region82: #{normal_prediction_forward.1} parent=5 // pred_region
        %s2984 = ssub.s32 %s14, 2
        // Predicated region
        $region84: #{normal_prediction_forward.1} parent=82 // pred_check
          %p2985 = pneg %p232
        $region85: #{normal_prediction_forward.1} parent=82 // pred_check_branch
          %2987 = sbr.rel (%p2985) target = $region87
        $region86: #{normal_prediction_forward.1} parent=82 // pred_region
          %s2988 = smul.u32 4, %s26
          %p2989 = scmp.lt.s32.totalorder %s25, 1
          %s2990 = scalar_select %p2989, %s25, 1
          %p2991 = scmp.lt.s32.totalorder %s2988, 7
          %s2992 = scalar_select %p2991, %s2988, 7
          %s2993 = smul.addr %s2990, 8
          %s2994 = sadd.s32 %s2992, %s2993
          %s2995 = smul.addr %s2994, 8
          %s2996 = scalar_lea.vmem %s8, %s2995
        $region87: #{normal_prediction_forward.1} parent=82 // pred_fallthru
          _
      $region83: #{normal_prediction_forward.1} parent=5 // pred_fallthru
        _
    $region6: #{normal_prediction_forward.1} parent=1 // loop_footer
      %s18 = sadd.s32 1, %s14
    $region7: #{normal_prediction_forward.1} parent=1 // loop_footer_branch
      %13 = sbr.rel target = $region3
    $region8: #{normal_prediction_forward.1} parent=1 // loop_exit
      _

</llo_original>
